<compile_context>
chip_gen: v7x
topology: tpu7x:2x2x1
jax: 0.10.0
libtpu: 0.0.40
codegen_flags: <defaults>
</compile_context>

<pallas_src>
import functools
import math

import jax
import jax.numpy as jnp
from jax.experimental import pallas as pl
from jax.experimental.pallas import tpu as pltpu

EPS = 1e-8


def _l2norm(x, axis=-1, scale=None):
    # torch l2norm: X / (sqrt(sum(X^2)) + eps) — eps stays OUTSIDE the sqrt.
    norm = jnp.sqrt(jnp.sum(x * x, axis=axis, keepdims=True)) + EPS
    r = pl.reciprocal(norm, approx=True)            # EUP slot; frees a VALU divide pass
    if scale is not None:
        r = r * scale                               # fold e.g. `smooth` into the reciprocal
    return x * r


def _softmax(x, axis):
    # max-subtracted softmax with the divide on the EUP.
    m = jnp.max(x, axis=axis, keepdims=True)
    e = jnp.exp(x - m)
    return e * pl.reciprocal(jnp.sum(e, axis=axis, keepdims=True), approx=True)


def _sim_kernel(lens_ref,                       # SMEM (n_caption,) int32  [scalar prefetch]
                cap_ref,                        # VMEM (W, D)       f32   caption i
                img_ref,                        # VMEM (TN, R, D)   bf16  image tile j (host pre-cast)
                alv_w_ref, alv_b_ref,           # (D, S) bf16 / (1, S) f32
                rar_k_w_ref, rar_k_b_ref,       # (M, S, S) bf16 / (M, 1, S) f32
                rar_q_w_ref, rar_q_b_ref,       # (M, S, S) bf16 / (M, 1, S) f32
                rar_v_w_ref, rar_v_b_ref,       # (M, 1, S) f32  / (M, 1, 1) f32
                eval_w_ref, eval_b_ref,         # (1, S) bf16 / (1, 1) f32
                out_ref,                        # VMEM (1, TN) f32
                *, smooth, rar_steps):
    tile_n, n_regions, d = img_ref.shape
    n_word_max = cap_ref.shape[0]
    s = alv_w_ref.shape[1]

    i = pl.program_id(1)                        # caption index (inner grid axis)
    n_word = lens_ref[i]

    # ---------------- word mask for padded positions ----------------
    word_ids = jax.lax.broadcasted_iota(jnp.int32, (n_word_max, 1), 0)    # (W, 1)
    word_mask = word_ids < n_word                                         # (W, 1) bool
    mask_f = word_mask.astype(jnp.float32)

    cap = jnp.where(word_mask, cap_ref[...], 0.0)                         # (W, D) padded rows -> 0
    cap_bf = cap.astype(jnp.bfloat16)
    img_bf = img_ref[...]                                                 # (TN, R, D) bf16, no cast

    # ---------------- cross_attention (t2i: query = caption words, context = regions) ----
    # TODO(synk): the fully lane-dense 2-D score matmul (cap @ img_flat.T -> (W, TN*R))
    # suggested in review needs a (W, TN, R) -> (TN, W, R) relayout whose Mosaic lowering
    # is unvalidated here; we keep the proven batched einsum and bound the bf16 query
    # broadcast to the image tile (TN*W*D bf16) instead of the full batch.
    query_b = jnp.broadcast_to(cap_bf[None], (tile_n, n_word_max, d))
    attn = jnp.einsum('nwd,nrd->nwr', query_b, img_bf,
                      preferred_element_type=jnp.float32)                 # (TN, W, R)
    attn = jnp.where(attn > 0, attn, 0.1 * attn)                          # LeakyReLU(0.1)
    # l2norm over words per (n, r) with `smooth` folded into the reciprocal; padded word
    # rows are exactly zero, so the batched norm matches the length-sliced reference.
    attn = _l2norm(attn, axis=1, scale=smooth)
    attn = _softmax(attn, axis=2)                                         # softmax over regions
    wcontext = jnp.einsum('nwr,nrd->nwd', attn.astype(jnp.bfloat16), img_bf,
                          preferred_element_type=jnp.float32)             # (TN, W, D)
    wcontext = _l2norm(wcontext, axis=-1)

    # ---------------- Alignment_vector: (TN*W, D) @ (D, S) on the MXU (bf16 in, f32 acc)
    diff = cap[None, :, :] - wcontext
    sim_rep_bf = (diff * diff).astype(jnp.bfloat16)                       # fused square + cast
    sim_mid = jnp.dot(sim_rep_bf.reshape(tile_n * n_word_max, d), alv_w_ref[...],
                      preferred_element_type=jnp.float32) + alv_b_ref[...]
    sim_mid = _l2norm(sim_mid, axis=-1)                                   # (TN*W, S)
    sim_mid_bf = sim_mid.astype(jnp.bfloat16)
    sim_mid3 = sim_mid.reshape(tile_n, n_word_max, s)                     # (TN, W, S)

    # ---------------- masked mean over valid words
    inv_nw = 1.0 / jnp.maximum(n_word, 1).astype(jnp.float32)
    sim_hig = jnp.sum(sim_mid3 * mask_f[None, :, :], axis=1) * inv_nw     # (TN, S)

    # ---------------- Aggregation_regulator chain (Dropout = identity in eval mode)
    for m in range(rar_steps):
        mid_k = jnp.tanh(
            jnp.dot(sim_mid_bf, rar_k_w_ref[m],
                    preferred_element_type=jnp.float32) + rar_k_b_ref[m])     # (TN*W, S)
        hig_q = jnp.tanh(
            jnp.dot(sim_hig.astype(jnp.bfloat16), rar_q_w_ref[m],
                    preferred_element_type=jnp.float32) + rar_q_b_ref[m])     # (TN, S)
        w3 = mid_k.reshape(tile_n, n_word_max, s) * hig_q[:, None, :]         # (TN, W, S)
        # NOTE: logits kept in the proven (TN, W, 1) layout; reshaping a 2-D (TN, W) logit
        # back against sim_mid3 needs a lane->sublane relayout we have not validated, and
        # the absolute cost of this 1-lane softmax is tiny.
        logits = jnp.sum(w3 * rar_v_w_ref[m][None], axis=-1,
                         keepdims=True) + rar_v_b_ref[m][None]                # (TN, W, 1)
        logits = jnp.where(word_mask[None, :, :], logits, -1e30)              # mask padded words
        aw = _softmax(logits, axis=1)                                         # softmax over words
        sim_hig = _l2norm(jnp.sum(aw * sim_mid3, axis=1), axis=-1)            # (TN, S)

    # ---------------- sim_eval_w + sigmoid  (a @ b.T -> lane-dense (1, TN) output block)
    logit = jax.lax.dot_general(eval_w_ref[...], sim_hig.astype(jnp.bfloat16),
                                dimension_numbers=(((1,), (1,)), ((), ())),
                                preferred_element_type=jnp.float32)            # (1, TN)
    out_ref[...] = jax.nn.sigmoid(logit + eval_b_ref[...])


def encoder_similarity_forward(img_emb, cap_emb, cap_lens, params, *,
                               smooth, rar_steps, tile_n=None):
    """Mirrors EncoderSimilarity.forward for the 'only_rar' / 't2i' configuration."""
    img_emb = jnp.asarray(img_emb, jnp.float32)
    cap_emb = jnp.asarray(cap_emb, jnp.float32)
    cap_lens = jnp.asarray(cap_lens, jnp.int32)

    n_image, n_regions, embed_dim = img_emb.shape
    n_caption, max_words, _ = cap_emb.shape
    sim_dim = params['alv_w'].shape[1]

    # Image-tile size bounds peak VMEM and gives the grid enough parallel units.
    # Rule of thumb from review: 32-64 on v7x (64 MiB VMEM), up to 128 on v5e/v6e.
    if tile_n is None:
        tile_n = min(n_image, 64)
    n_tiles = -(-n_image // tile_n)
    n_image_pad = n_tiles * tile_n
    if n_image_pad != n_image:
        # zero image rows produce finite garbage that is sliced off below.
        img_emb = jnp.pad(img_emb, ((0, n_image_pad - n_image), (0, 0), (0, 0)))

    # ---------------- host-side dtype prep (cast once, not per grid step) ----------------
    img_bf = img_emb.astype(jnp.bfloat16)
    weights = (params['alv_w'].astype(jnp.bfloat16), params['alv_b'],
               params['rar_k_w'].astype(jnp.bfloat16), params['rar_k_b'],
               params['rar_q_w'].astype(jnp.bfloat16), params['rar_q_b'],
               params['rar_v_w'], params['rar_v_b'],
               params['eval_w'].astype(jnp.bfloat16), params['eval_b'])

    kernel = functools.partial(_sim_kernel, smooth=float(smooth), rar_steps=int(rar_steps))

    def resident(shape):
        # Full-array block with a constant index_map -> DMA'd once, reused across the grid.
        return pl.BlockSpec(shape, lambda j, i, lens: (0,) * len(shape))

    grid_spec = pltpu.PrefetchScalarGridSpec(
        num_scalar_prefetch=1,                       # cap_lens -> SMEM
        grid=(n_tiles, n_caption),                   # image tile OUTER: big tile reused across captions
        in_specs=[pl.BlockSpec((None, max_words, embed_dim), lambda j, i, lens: (i, 0, 0)),
                  pl.BlockSpec((tile_n, n_regions, embed_dim), lambda j, i, lens: (j, 0, 0))]
                 + [resident(w.shape) for w in weights],
        out_specs=pl.BlockSpec((None, 1, tile_n),
                               lambda j, i, lens: (i * n_tiles + j, 0, 0)),
    )

    # ---------------- explicit VMEM budget (v5e scoped default is only 16 MiB) ------------
    f32, bf16 = 4, 2
    w_bytes = sum(int(w.size) * w.dtype.itemsize for w in weights)
    pipeline_bytes = 2 * (tile_n * n_regions * embed_dim * bf16       # img tile
                          + max_words * embed_dim * f32               # caption tile
                          + tile_n * f32)                             # output tile
    inter_bytes = (tile_n * max_words * embed_dim * (2 * bf16 + 2 * f32)  # query_b/sim_rep + wcontext/diff
                   + 2 * tile_n * max_words * n_regions * f32             # attn / softmax temps
                   + 4 * tile_n * max_words * sim_dim * f32)              # sim_mid(+bf16) / RAR temps
    est = 2 * w_bytes + pipeline_bytes + inter_bytes
    vmem_limit = int(min(max(3 * est // 2 + (1 << 20), 16 << 20), 64 << 20))

    out = pl.pallas_call(
        kernel,
        out_shape=jax.ShapeDtypeStruct((n_caption * n_tiles, 1, tile_n), jnp.float32),
        grid_spec=grid_spec,
        compiler_params=pltpu.CompilerParams(
            dimension_semantics=("parallel", "parallel"),   # both axes independent (v7x megacore)
            vmem_limit_bytes=vmem_limit),
    )(cap_lens, cap_emb, img_bf, *weights)

    out = out.reshape(n_caption, n_image_pad)[:, :n_image]
    return out.T                                             # (n_image, n_caption)


def _xavier_uniform(key, in_f, out_f):
    r = math.sqrt(6.0) / math.sqrt(in_f + out_f)
    return jax.random.uniform(key, (in_f, out_f), jnp.float32, -r, r)


def init_params(key, embed_dim, sim_dim, rar_steps):
    keys = jax.random.split(key, 2 + 3 * rar_steps)
    params = {
        'alv_w': _xavier_uniform(keys[0], embed_dim, sim_dim),     # sim_transform_w
        'alv_b': jnp.zeros((1, sim_dim), jnp.float32),
        'eval_w': _xavier_uniform(keys[1], sim_dim, 1).T,          # sim_eval_w -> (1, S)
        'eval_b': jnp.zeros((1, 1), jnp.float32),
    }
    k_w, q_w, v_w = [], [], []
    for m in range(rar_steps):
        k_w.append(_xavier_uniform(keys[2 + 3 * m], sim_dim, sim_dim))
        q_w.append(_xavier_uniform(keys[3 + 3 * m], sim_dim, sim_dim))
        v_w.append(_xavier_uniform(keys[4 + 3 * m], sim_dim, 1).T)  # (1, S)
    params['rar_k_w'] = jnp.stack(k_w)                             # (steps, S, S)
    params['rar_k_b'] = jnp.zeros((rar_steps, 1, sim_dim), jnp.float32)
    params['rar_q_w'] = jnp.stack(q_w)
    params['rar_q_b'] = jnp.zeros((rar_steps, 1, sim_dim), jnp.float32)
    params['rar_v_w'] = jnp.stack(v_w)                             # (steps, 1, S)
    params['rar_v_b'] = jnp.zeros((rar_steps, 1, 1), jnp.float32)
    return params


if __name__ == "__main__":
    # Static "opt" configuration
    rar_steps = 2          # opt.rar_step
    smooth = 9.0           # opt.t2i_smooth
    embed_dim, sim_dim = 32, 16

    n_image, n_regions = 2, 16
    n_caption, max_words = 3, 8
    cap_lens = [8, 6, 7]

    key = jax.random.PRNGKey(0)
    k_img, k_cap, k_par = jax.random.split(key, 3)
    img_emb = jax.random.normal(k_img, (n_image, n_regions, embed_dim), jnp.float32)
    cap_emb = jax.random.normal(k_cap, (n_caption, max_words, embed_dim), jnp.float32)
    params = init_params(k_par, embed_dim, sim_dim, rar_steps)

    out = encoder_similarity_forward(img_emb, cap_emb, cap_lens, params,
                                     smooth=smooth, rar_steps=rar_steps)
    out = jax.block_until_ready(out)
    assert out.shape == (n_image, n_caption), out.shape
    assert bool(jnp.all(jnp.isfinite(out)))
    # TODO(synk): 'only_rcr' / 'coop_rcar' regulator branches (Correpondence_regulator)
    # not wired up; this kernel implements the 'only_rar' configuration end-to-end.
    print("KERNEL_OK")
</pallas_src>

<mosaic_0001>
module attributes {stable_mosaic.version = 11 : i64} {
  func.func @_sim_kernel(%arg0: i32, %arg1: i32, %arg2: memref<3xi32, #tpu.memory_space<smem>>, %arg3: memref<1x8x32xf32, #tpu.memory_space<vmem>>, %arg4: memref<2x16x32xbf16, #tpu.memory_space<vmem>>, %arg5: memref<32x16xbf16, #tpu.memory_space<vmem>>, %arg6: memref<1x16xf32, #tpu.memory_space<vmem>>, %arg7: memref<2x16x16xbf16, #tpu.memory_space<vmem>>, %arg8: memref<2x1x16xf32, #tpu.memory_space<vmem>>, %arg9: memref<2x16x16xbf16, #tpu.memory_space<vmem>>, %arg10: memref<2x1x16xf32, #tpu.memory_space<vmem>>, %arg11: memref<2x1x16xf32, #tpu.memory_space<vmem>>, %arg12: memref<2x1x1xf32, #tpu.memory_space<vmem>>, %arg13: memref<1x16xbf16, #tpu.memory_space<vmem>>, %arg14: memref<1x1xf32, #tpu.memory_space<vmem>>, %arg15: memref<1x1x2xf32, #tpu.memory_space<vmem>>) attributes {dimension_semantics = [#tpu.dimension_semantics<parallel>, #tpu.dimension_semantics<parallel>], iteration_bounds = array<i64: 1, 3>, scalar_prefetch = 1 : i64, scratch_operands = 0 : i64, tpu.core_type = #tpu.core_type<tc>, window_params = [{transform_indices = @transform_0, window_bounds = array<i64: 1, 8, 32>}, {transform_indices = @transform_1, window_bounds = array<i64: 2, 16, 32>}, {pipeline_mode = #tpu.pipeline_mode<synchronous>, transform_indices = @transform_2, window_bounds = array<i64: 32, 16>}, {pipeline_mode = #tpu.pipeline_mode<synchronous>, transform_indices = @transform_3, window_bounds = array<i64: 1, 16>}, {pipeline_mode = #tpu.pipeline_mode<synchronous>, transform_indices = @transform_4, window_bounds = array<i64: 2, 16, 16>}, {pipeline_mode = #tpu.pipeline_mode<synchronous>, transform_indices = @transform_5, window_bounds = array<i64: 2, 1, 16>}, {pipeline_mode = #tpu.pipeline_mode<synchronous>, transform_indices = @transform_6, window_bounds = array<i64: 2, 16, 16>}, {pipeline_mode = #tpu.pipeline_mode<synchronous>, transform_indices = @transform_7, window_bounds = array<i64: 2, 1, 16>}, {pipeline_mode = #tpu.pipeline_mode<synchronous>, transform_indices = @transform_8, window_bounds = array<i64: 2, 1, 16>}, {pipeline_mode = #tpu.pipeline_mode<synchronous>, transform_indices = @transform_9, window_bounds = array<i64: 2, 1, 1>}, {pipeline_mode = #tpu.pipeline_mode<synchronous>, transform_indices = @transform_10, window_bounds = array<i64: 1, 16>}, {pipeline_mode = #tpu.pipeline_mode<synchronous>, transform_indices = @transform_11, window_bounds = array<i64: 1, 1>}, {transform_indices = @transform_12, window_bounds = array<i64: 1, 1, 2>}]} {
    %0 = arith.index_cast %arg1 : i32 to index
    %1 = memref.load %arg2[%0] : memref<3xi32, #tpu.memory_space<smem>>
    %2 = tpu.iota {dimensions = array<i32: 0>} : vector<8x1xi32>
    %3 = vector.broadcast %1 : i32 to vector<8x1xi32>
    %4 = arith.cmpi slt, %2, %3 : vector<8x1xi32>
    %5 = arith.extui %4 : vector<8x1xi1> to vector<8x1xi32>
    %6 = arith.sitofp %5 : vector<8x1xi32> to vector<8x1xf32>
    %c0 = arith.constant 0 : index
    %c0_0 = arith.constant 0 : index
    %c0_1 = arith.constant 0 : index
    %7 = vector.load %arg3[%c0, %c0_0, %c0_1] : memref<1x8x32xf32, #tpu.memory_space<vmem>>, vector<1x8x32xf32>
    %8 = vector.shape_cast %7 : vector<1x8x32xf32> to vector<8x32xf32>
    %cst = arith.constant 0.000000e+00 : f32
    %9 = vector.shape_cast %4 : vector<8x1xi1> to vector<8x1xi1>
    %10 = vector.broadcast %9 : vector<8x1xi1> to vector<8x32xi1>
    %11 = vector.broadcast %cst : f32 to vector<8x32xf32>
    %12 = arith.select %10, %8, %11 : vector<8x32xi1>, vector<8x32xf32>
    %13 = arith.truncf %12 : vector<8x32xf32> to vector<8x32xbf16>
    %c0_2 = arith.constant 0 : index
    %c0_3 = arith.constant 0 : index
    %c0_4 = arith.constant 0 : index
    %14 = vector.load %arg4[%c0_2, %c0_3, %c0_4] : memref<2x16x32xbf16, #tpu.memory_space<vmem>>, vector<2x16x32xbf16>
    %15 = vector.shape_cast %13 : vector<8x32xbf16> to vector<1x8x32xbf16>
    %16 = vector.shape_cast %15 : vector<1x8x32xbf16> to vector<1x8x32xbf16>
    %17 = vector.broadcast %16 : vector<1x8x32xbf16> to vector<2x8x32xbf16>
    "tpu.trace_start"() <{level = 10 : i32, message = "nwd,nrd->nwr"}> : () -> ()
    %cst_5 = arith.constant dense<0.000000e+00> : vector<2x8x16xf32>
    %18 = tpu.matmul %17, %14, %cst_5 {dimension_numbers = #tpu.dot_dimension_numbers<[2], [2], [1], [1], [0, 0, 0, 1, 1, 1], [0], [0]>} : vector<2x8x32xbf16>, vector<2x16x32xbf16>, vector<2x8x16xf32> -> vector<2x8x16xf32>
    %cst_6 = arith.constant 0.000000e+00 : f32
    "tpu.trace_stop"() : () -> ()
    %19 = vector.broadcast %cst_6 : f32 to vector<2x8x16xf32>
    %20 = arith.cmpf ogt, %18, %19 : vector<2x8x16xf32>
    %cst_7 = arith.constant 1.000000e-01 : f32
    %21 = vector.broadcast %cst_7 : f32 to vector<2x8x16xf32>
    %22 = arith.mulf %21, %18 : vector<2x8x16xf32>
    %23 = arith.select %20, %18, %22 : vector<2x8x16xi1>, vector<2x8x16xf32>
    %24 = arith.mulf %23, %23 : vector<2x8x16xf32>
    %cst_8 = arith.constant dense<0.000000e+00> : vector<2x16xf32>
    %25 = vector.multi_reduction <add>, %24, %cst_8 [1] : vector<2x8x16xf32> to vector<2x16xf32>
    %26 = vector.shape_cast %25 : vector<2x16xf32> to vector<2x1x16xf32>
    %27 = math.sqrt %26 : vector<2x1x16xf32>
    %cst_9 = arith.constant 9.99999993E-9 : f32
    %28 = vector.broadcast %cst_9 : f32 to vector<2x1x16xf32>
    %29 = arith.addf %27, %28 : vector<2x1x16xf32>
    %30 = tpu.reciprocal %29 {approx = true} : vector<2x1x16xf32> -> vector<2x1x16xf32>
    %cst_10 = arith.constant 9.000000e+00 : f32
    %31 = vector.broadcast %cst_10 : f32 to vector<2x1x16xf32>
    %32 = arith.mulf %30, %31 : vector<2x1x16xf32>
    %33 = vector.broadcast %32 : vector<2x1x16xf32> to vector<2x8x16xf32>
    %34 = arith.mulf %23, %33 : vector<2x8x16xf32>
    %cst_11 = arith.constant dense<0xFF800000> : vector<2x8xf32>
    %35 = vector.multi_reduction <maximumf>, %34, %cst_11 [2] : vector<2x8x16xf32> to vector<2x8xf32>
    %36 = vector.shape_cast %35 : vector<2x8xf32> to vector<2x8x1xf32>
    %37 = vector.broadcast %36 : vector<2x8x1xf32> to vector<2x8x16xf32>
    %38 = arith.subf %34, %37 : vector<2x8x16xf32>
    %39 = math.exp %38 : vector<2x8x16xf32>
    %cst_12 = arith.constant dense<0.000000e+00> : vector<2x8xf32>
    %40 = vector.multi_reduction <add>, %39, %cst_12 [2] : vector<2x8x16xf32> to vector<2x8xf32>
    %41 = vector.shape_cast %40 : vector<2x8xf32> to vector<2x8x1xf32>
    %42 = tpu.reciprocal %41 {approx = true} : vector<2x8x1xf32> -> vector<2x8x1xf32>
    %43 = vector.broadcast %42 : vector<2x8x1xf32> to vector<2x8x16xf32>
    %44 = arith.mulf %39, %43 : vector<2x8x16xf32>
    %45 = arith.truncf %44 : vector<2x8x16xf32> to vector<2x8x16xbf16>
    "tpu.trace_start"() <{level = 10 : i32, message = "nwr,nrd->nwd"}> : () -> ()
    %cst_13 = arith.constant dense<0.000000e+00> : vector<2x8x32xf32>
    %46 = tpu.matmul %45, %14, %cst_13 {dimension_numbers = #tpu.dot_dimension_numbers<[2], [1], [1], [2], [0, 0, 0, 1, 1, 2], [0], [0]>} : vector<2x8x16xbf16>, vector<2x16x32xbf16>, vector<2x8x32xf32> -> vector<2x8x32xf32>
    "tpu.trace_stop"() : () -> ()
    %47 = arith.mulf %46, %46 : vector<2x8x32xf32>
    %cst_14 = arith.constant dense<0.000000e+00> : vector<2x8xf32>
    %48 = vector.multi_reduction <add>, %47, %cst_14 [2] : vector<2x8x32xf32> to vector<2x8xf32>
    %49 = vector.shape_cast %48 : vector<2x8xf32> to vector<2x8x1xf32>
    %50 = math.sqrt %49 : vector<2x8x1xf32>
    %cst_15 = arith.constant 9.99999993E-9 : f32
    %51 = vector.broadcast %cst_15 : f32 to vector<2x8x1xf32>
    %52 = arith.addf %50, %51 : vector<2x8x1xf32>
    %53 = tpu.reciprocal %52 {approx = true} : vector<2x8x1xf32> -> vector<2x8x1xf32>
    %54 = vector.broadcast %53 : vector<2x8x1xf32> to vector<2x8x32xf32>
    %55 = arith.mulf %46, %54 : vector<2x8x32xf32>
    %56 = vector.shape_cast %12 : vector<8x32xf32> to vector<1x8x32xf32>
    %57 = vector.broadcast %56 : vector<1x8x32xf32> to vector<2x8x32xf32>
    %58 = arith.subf %57, %55 : vector<2x8x32xf32>
    %59 = arith.mulf %58, %58 : vector<2x8x32xf32>
    %60 = arith.truncf %59 : vector<2x8x32xf32> to vector<2x8x32xbf16>
    %61 = vector.shape_cast %60 : vector<2x8x32xbf16> to vector<16x32xbf16>
    %c0_16 = arith.constant 0 : index
    %c0_17 = arith.constant 0 : index
    %62 = vector.load %arg5[%c0_16, %c0_17] : memref<32x16xbf16, #tpu.memory_space<vmem>>, vector<32x16xbf16>
    %cst_18 = arith.constant dense<0.000000e+00> : vector<16x16xf32>
    %63 = tpu.matmul %61, %62, %cst_18 {dimension_numbers = #tpu.dot_dimension_numbers<[1], [0], [0], [1], [0, 0, 1, 1], [], []>} : vector<16x32xbf16>, vector<32x16xbf16>, vector<16x16xf32> -> vector<16x16xf32>
    %c0_19 = arith.constant 0 : index
    %c0_20 = arith.constant 0 : index
    %64 = vector.load %arg6[%c0_19, %c0_20] : memref<1x16xf32, #tpu.memory_space<vmem>>, vector<1x16xf32>
    %65 = vector.broadcast %64 : vector<1x16xf32> to vector<16x16xf32>
    %66 = arith.addf %63, %65 : vector<16x16xf32>
    %67 = arith.mulf %66, %66 : vector<16x16xf32>
    %cst_21 = arith.constant dense<0.000000e+00> : vector<16xf32>
    %68 = vector.multi_reduction <add>, %67, %cst_21 [1] : vector<16x16xf32> to vector<16xf32>
    %69 = vector.shape_cast %68 : vector<16xf32> to vector<16x1xf32>
    %70 = math.sqrt %69 : vector<16x1xf32>
    %cst_22 = arith.constant 9.99999993E-9 : f32
    %71 = vector.broadcast %cst_22 : f32 to vector<16x1xf32>
    %72 = arith.addf %70, %71 : vector<16x1xf32>
    %73 = tpu.reciprocal %72 {approx = true} : vector<16x1xf32> -> vector<16x1xf32>
    %74 = vector.broadcast %73 : vector<16x1xf32> to vector<16x16xf32>
    %75 = arith.mulf %66, %74 : vector<16x16xf32>
    %76 = arith.truncf %75 : vector<16x16xf32> to vector<16x16xbf16>
    %77 = vector.shape_cast %75 : vector<16x16xf32> to vector<2x8x16xf32>
    %c1_i32 = arith.constant 1 : i32
    %78 = arith.maxsi %1, %c1_i32 : i32
    %79 = arith.sitofp %78 : i32 to f32
    %cst_23 = arith.constant 1.000000e+00 : f32
    %80 = arith.divf %cst_23, %79 : f32
    %81 = vector.shape_cast %6 : vector<8x1xf32> to vector<1x8x1xf32>
    %82 = vector.broadcast %81 : vector<1x8x1xf32> to vector<2x8x16xf32>
    %83 = arith.mulf %77, %82 : vector<2x8x16xf32>
    %cst_24 = arith.constant dense<0.000000e+00> : vector<2x16xf32>
    %84 = vector.multi_reduction <add>, %83, %cst_24 [1] : vector<2x8x16xf32> to vector<2x16xf32>
    %85 = vector.broadcast %80 : f32 to vector<2x16xf32>
    %86 = arith.mulf %84, %85 : vector<2x16xf32>
    %c0_25 = arith.constant 0 : index
    %c0_26 = arith.constant 0 : index
    %c0_27 = arith.constant 0 : index
    %87 = vector.load %arg7[%c0_25, %c0_26, %c0_27] : memref<2x16x16xbf16, #tpu.memory_space<vmem>>, vector<1x16x16xbf16>
    %88 = vector.shape_cast %87 : vector<1x16x16xbf16> to vector<16x16xbf16>
    %cst_28 = arith.constant dense<0.000000e+00> : vector<16x16xf32>
    %89 = tpu.matmul %76, %88, %cst_28 {dimension_numbers = #tpu.dot_dimension_numbers<[1], [0], [0], [1], [0, 0, 1, 1], [], []>} : vector<16x16xbf16>, vector<16x16xbf16>, vector<16x16xf32> -> vector<16x16xf32>
    %c0_29 = arith.constant 0 : index
    %c0_30 = arith.constant 0 : index
    %c0_31 = arith.constant 0 : index
    %90 = vector.load %arg8[%c0_29, %c0_30, %c0_31] : memref<2x1x16xf32, #tpu.memory_space<vmem>>, vector<1x1x16xf32>
    %91 = vector.shape_cast %90 : vector<1x1x16xf32> to vector<1x16xf32>
    %92 = vector.broadcast %91 : vector<1x16xf32> to vector<16x16xf32>
    %93 = arith.addf %89, %92 : vector<16x16xf32>
    %94 = math.tanh %93 : vector<16x16xf32>
    %95 = arith.truncf %86 : vector<2x16xf32> to vector<2x16xbf16>
    %c0_32 = arith.constant 0 : index
    %c0_33 = arith.constant 0 : index
    %c0_34 = arith.constant 0 : index
    %96 = vector.load %arg9[%c0_32, %c0_33, %c0_34] : memref<2x16x16xbf16, #tpu.memory_space<vmem>>, vector<1x16x16xbf16>
    %97 = vector.shape_cast %96 : vector<1x16x16xbf16> to vector<16x16xbf16>
    %cst_35 = arith.constant dense<0.000000e+00> : vector<2x16xf32>
    %98 = tpu.matmul %95, %97, %cst_35 {dimension_numbers = #tpu.dot_dimension_numbers<[1], [0], [0], [1], [0, 0, 1, 1], [], []>} : vector<2x16xbf16>, vector<16x16xbf16>, vector<2x16xf32> -> vector<2x16xf32>
    %c0_36 = arith.constant 0 : index
    %c0_37 = arith.constant 0 : index
    %c0_38 = arith.constant 0 : index
    %99 = vector.load %arg10[%c0_36, %c0_37, %c0_38] : memref<2x1x16xf32, #tpu.memory_space<vmem>>, vector<1x1x16xf32>
    %100 = vector.shape_cast %99 : vector<1x1x16xf32> to vector<1x16xf32>
    %101 = vector.broadcast %100 : vector<1x16xf32> to vector<2x16xf32>
    %102 = arith.addf %98, %101 : vector<2x16xf32>
    %103 = math.tanh %102 : vector<2x16xf32>
    %104 = vector.shape_cast %94 : vector<16x16xf32> to vector<2x8x16xf32>
    %105 = vector.shape_cast %103 : vector<2x16xf32> to vector<2x1x16xf32>
    %106 = vector.broadcast %105 : vector<2x1x16xf32> to vector<2x8x16xf32>
    %107 = arith.mulf %104, %106 : vector<2x8x16xf32>
    %c0_39 = arith.constant 0 : index
    %c0_40 = arith.constant 0 : index
    %c0_41 = arith.constant 0 : index
    %108 = vector.load %arg11[%c0_39, %c0_40, %c0_41] : memref<2x1x16xf32, #tpu.memory_space<vmem>>, vector<1x1x16xf32>
    %109 = vector.shape_cast %108 : vector<1x1x16xf32> to vector<1x16xf32>
    %110 = vector.shape_cast %109 : vector<1x16xf32> to vector<1x1x16xf32>
    %111 = vector.broadcast %110 : vector<1x1x16xf32> to vector<2x8x16xf32>
    %112 = arith.mulf %107, %111 : vector<2x8x16xf32>
    %cst_42 = arith.constant dense<0.000000e+00> : vector<2x8xf32>
    %113 = vector.multi_reduction <add>, %112, %cst_42 [2] : vector<2x8x16xf32> to vector<2x8xf32>
    %114 = vector.shape_cast %113 : vector<2x8xf32> to vector<2x8x1xf32>
    %c0_43 = arith.constant 0 : index
    %c0_44 = arith.constant 0 : index
    %c0_45 = arith.constant 0 : index
    %115 = vector.load %arg12[%c0_43, %c0_44, %c0_45] : memref<2x1x1xf32, #tpu.memory_space<vmem>>, vector<1x1x1xf32>
    %116 = vector.shape_cast %115 : vector<1x1x1xf32> to vector<1x1xf32>
    %117 = vector.shape_cast %116 : vector<1x1xf32> to vector<1x1x1xf32>
    %118 = vector.broadcast %117 : vector<1x1x1xf32> to vector<2x8x1xf32>
    %119 = arith.addf %114, %118 : vector<2x8x1xf32>
    %120 = vector.shape_cast %4 : vector<8x1xi1> to vector<1x8x1xi1>
    %cst_46 = arith.constant -1.000000e+30 : f32
    %121 = vector.shape_cast %120 : vector<1x8x1xi1> to vector<1x8x1xi1>
    %122 = vector.broadcast %121 : vector<1x8x1xi1> to vector<2x8x1xi1>
    %123 = vector.broadcast %cst_46 : f32 to vector<2x8x1xf32>
    %124 = arith.select %122, %119, %123 : vector<2x8x1xi1>, vector<2x8x1xf32>
    %cst_47 = arith.constant dense<0xFF800000> : vector<2x1xf32>
    %125 = vector.multi_reduction <maximumf>, %124, %cst_47 [1] : vector<2x8x1xf32> to vector<2x1xf32>
    %126 = vector.shape_cast %125 : vector<2x1xf32> to vector<2x1x1xf32>
    %127 = vector.broadcast %126 : vector<2x1x1xf32> to vector<2x8x1xf32>
    %128 = arith.subf %124, %127 : vector<2x8x1xf32>
    %129 = math.exp %128 : vector<2x8x1xf32>
    %cst_48 = arith.constant dense<0.000000e+00> : vector<2x1xf32>
    %130 = vector.multi_reduction <add>, %129, %cst_48 [1] : vector<2x8x1xf32> to vector<2x1xf32>
    %131 = vector.shape_cast %130 : vector<2x1xf32> to vector<2x1x1xf32>
    %132 = tpu.reciprocal %131 {approx = true} : vector<2x1x1xf32> -> vector<2x1x1xf32>
    %133 = vector.broadcast %132 : vector<2x1x1xf32> to vector<2x8x1xf32>
    %134 = arith.mulf %129, %133 : vector<2x8x1xf32>
    %135 = vector.broadcast %134 : vector<2x8x1xf32> to vector<2x8x16xf32>
    %136 = arith.mulf %135, %77 : vector<2x8x16xf32>
    %cst_49 = arith.constant dense<0.000000e+00> : vector<2x16xf32>
    %137 = vector.multi_reduction <add>, %136, %cst_49 [1] : vector<2x8x16xf32> to vector<2x16xf32>
    %138 = arith.mulf %137, %137 : vector<2x16xf32>
    %cst_50 = arith.constant dense<0.000000e+00> : vector<2xf32>
    %139 = vector.multi_reduction <add>, %138, %cst_50 [1] : vector<2x16xf32> to vector<2xf32>
    %140 = vector.shape_cast %139 : vector<2xf32> to vector<2x1xf32>
    %141 = math.sqrt %140 : vector<2x1xf32>
    %cst_51 = arith.constant 9.99999993E-9 : f32
    %142 = vector.broadcast %cst_51 : f32 to vector<2x1xf32>
    %143 = arith.addf %141, %142 : vector<2x1xf32>
    %144 = tpu.reciprocal %143 {approx = true} : vector<2x1xf32> -> vector<2x1xf32>
    %145 = vector.broadcast %144 : vector<2x1xf32> to vector<2x16xf32>
    %146 = arith.mulf %137, %145 : vector<2x16xf32>
    %c1 = arith.constant 1 : index
    %c0_52 = arith.constant 0 : index
    %c0_53 = arith.constant 0 : index
    %147 = vector.load %arg7[%c1, %c0_52, %c0_53] : memref<2x16x16xbf16, #tpu.memory_space<vmem>>, vector<1x16x16xbf16>
    %148 = vector.shape_cast %147 : vector<1x16x16xbf16> to vector<16x16xbf16>
    %cst_54 = arith.constant dense<0.000000e+00> : vector<16x16xf32>
    %149 = tpu.matmul %76, %148, %cst_54 {dimension_numbers = #tpu.dot_dimension_numbers<[1], [0], [0], [1], [0, 0, 1, 1], [], []>} : vector<16x16xbf16>, vector<16x16xbf16>, vector<16x16xf32> -> vector<16x16xf32>
    %c1_55 = arith.constant 1 : index
    %c0_56 = arith.constant 0 : index
    %c0_57 = arith.constant 0 : index
    %150 = vector.load %arg8[%c1_55, %c0_56, %c0_57] : memref<2x1x16xf32, #tpu.memory_space<vmem>>, vector<1x1x16xf32>
    %151 = vector.shape_cast %150 : vector<1x1x16xf32> to vector<1x16xf32>
    %152 = vector.broadcast %151 : vector<1x16xf32> to vector<16x16xf32>
    %153 = arith.addf %149, %152 : vector<16x16xf32>
    %154 = math.tanh %153 : vector<16x16xf32>
    %155 = arith.truncf %146 : vector<2x16xf32> to vector<2x16xbf16>
    %c1_58 = arith.constant 1 : index
    %c0_59 = arith.constant 0 : index
    %c0_60 = arith.constant 0 : index
    %156 = vector.load %arg9[%c1_58, %c0_59, %c0_60] : memref<2x16x16xbf16, #tpu.memory_space<vmem>>, vector<1x16x16xbf16>
    %157 = vector.shape_cast %156 : vector<1x16x16xbf16> to vector<16x16xbf16>
    %cst_61 = arith.constant dense<0.000000e+00> : vector<2x16xf32>
    %158 = tpu.matmul %155, %157, %cst_61 {dimension_numbers = #tpu.dot_dimension_numbers<[1], [0], [0], [1], [0, 0, 1, 1], [], []>} : vector<2x16xbf16>, vector<16x16xbf16>, vector<2x16xf32> -> vector<2x16xf32>
    %c1_62 = arith.constant 1 : index
    %c0_63 = arith.constant 0 : index
    %c0_64 = arith.constant 0 : index
    %159 = vector.load %arg10[%c1_62, %c0_63, %c0_64] : memref<2x1x16xf32, #tpu.memory_space<vmem>>, vector<1x1x16xf32>
    %160 = vector.shape_cast %159 : vector<1x1x16xf32> to vector<1x16xf32>
    %161 = vector.broadcast %160 : vector<1x16xf32> to vector<2x16xf32>
    %162 = arith.addf %158, %161 : vector<2x16xf32>
    %163 = math.tanh %162 : vector<2x16xf32>
    %164 = vector.shape_cast %154 : vector<16x16xf32> to vector<2x8x16xf32>
    %165 = vector.shape_cast %163 : vector<2x16xf32> to vector<2x1x16xf32>
    %166 = vector.broadcast %165 : vector<2x1x16xf32> to vector<2x8x16xf32>
    %167 = arith.mulf %164, %166 : vector<2x8x16xf32>
    %c1_65 = arith.constant 1 : index
    %c0_66 = arith.constant 0 : index
    %c0_67 = arith.constant 0 : index
    %168 = vector.load %arg11[%c1_65, %c0_66, %c0_67] : memref<2x1x16xf32, #tpu.memory_space<vmem>>, vector<1x1x16xf32>
    %169 = vector.shape_cast %168 : vector<1x1x16xf32> to vector<1x16xf32>
    %170 = vector.shape_cast %169 : vector<1x16xf32> to vector<1x1x16xf32>
    %171 = vector.broadcast %170 : vector<1x1x16xf32> to vector<2x8x16xf32>
    %172 = arith.mulf %167, %171 : vector<2x8x16xf32>
    %cst_68 = arith.constant dense<0.000000e+00> : vector<2x8xf32>
    %173 = vector.multi_reduction <add>, %172, %cst_68 [2] : vector<2x8x16xf32> to vector<2x8xf32>
    %174 = vector.shape_cast %173 : vector<2x8xf32> to vector<2x8x1xf32>
    %c1_69 = arith.constant 1 : index
    %c0_70 = arith.constant 0 : index
    %c0_71 = arith.constant 0 : index
    %175 = vector.load %arg12[%c1_69, %c0_70, %c0_71] : memref<2x1x1xf32, #tpu.memory_space<vmem>>, vector<1x1x1xf32>
    %176 = vector.shape_cast %175 : vector<1x1x1xf32> to vector<1x1xf32>
    %177 = vector.shape_cast %176 : vector<1x1xf32> to vector<1x1x1xf32>
    %178 = vector.broadcast %177 : vector<1x1x1xf32> to vector<2x8x1xf32>
    %179 = arith.addf %174, %178 : vector<2x8x1xf32>
    %180 = vector.shape_cast %4 : vector<8x1xi1> to vector<1x8x1xi1>
    %cst_72 = arith.constant -1.000000e+30 : f32
    %181 = vector.shape_cast %180 : vector<1x8x1xi1> to vector<1x8x1xi1>
    %182 = vector.broadcast %181 : vector<1x8x1xi1> to vector<2x8x1xi1>
    %183 = vector.broadcast %cst_72 : f32 to vector<2x8x1xf32>
    %184 = arith.select %182, %179, %183 : vector<2x8x1xi1>, vector<2x8x1xf32>
    %cst_73 = arith.constant dense<0xFF800000> : vector<2x1xf32>
    %185 = vector.multi_reduction <maximumf>, %184, %cst_73 [1] : vector<2x8x1xf32> to vector<2x1xf32>
    %186 = vector.shape_cast %185 : vector<2x1xf32> to vector<2x1x1xf32>
    %187 = vector.broadcast %186 : vector<2x1x1xf32> to vector<2x8x1xf32>
    %188 = arith.subf %184, %187 : vector<2x8x1xf32>
    %189 = math.exp %188 : vector<2x8x1xf32>
    %cst_74 = arith.constant dense<0.000000e+00> : vector<2x1xf32>
    %190 = vector.multi_reduction <add>, %189, %cst_74 [1] : vector<2x8x1xf32> to vector<2x1xf32>
    %191 = vector.shape_cast %190 : vector<2x1xf32> to vector<2x1x1xf32>
    %192 = tpu.reciprocal %191 {approx = true} : vector<2x1x1xf32> -> vector<2x1x1xf32>
    %193 = vector.broadcast %192 : vector<2x1x1xf32> to vector<2x8x1xf32>
    %194 = arith.mulf %189, %193 : vector<2x8x1xf32>
    %195 = vector.broadcast %194 : vector<2x8x1xf32> to vector<2x8x16xf32>
    %196 = arith.mulf %195, %77 : vector<2x8x16xf32>
    %cst_75 = arith.constant dense<0.000000e+00> : vector<2x16xf32>
    %197 = vector.multi_reduction <add>, %196, %cst_75 [1] : vector<2x8x16xf32> to vector<2x16xf32>
    %198 = arith.mulf %197, %197 : vector<2x16xf32>
    %cst_76 = arith.constant dense<0.000000e+00> : vector<2xf32>
    %199 = vector.multi_reduction <add>, %198, %cst_76 [1] : vector<2x16xf32> to vector<2xf32>
    %200 = vector.shape_cast %199 : vector<2xf32> to vector<2x1xf32>
    %201 = math.sqrt %200 : vector<2x1xf32>
    %cst_77 = arith.constant 9.99999993E-9 : f32
    %202 = vector.broadcast %cst_77 : f32 to vector<2x1xf32>
    %203 = arith.addf %201, %202 : vector<2x1xf32>
    %204 = tpu.reciprocal %203 {approx = true} : vector<2x1xf32> -> vector<2x1xf32>
    %205 = vector.broadcast %204 : vector<2x1xf32> to vector<2x16xf32>
    %206 = arith.mulf %197, %205 : vector<2x16xf32>
    %c0_78 = arith.constant 0 : index
    %c0_79 = arith.constant 0 : index
    %207 = vector.load %arg13[%c0_78, %c0_79] : memref<1x16xbf16, #tpu.memory_space<vmem>>, vector<1x16xbf16>
    %208 = arith.truncf %206 : vector<2x16xf32> to vector<2x16xbf16>
    %cst_80 = arith.constant dense<0.000000e+00> : vector<1x2xf32>
    %209 = tpu.matmul %207, %208, %cst_80 {dimension_numbers = #tpu.dot_dimension_numbers<[1], [1], [0], [0], [0, 0, 1, 0], [], []>} : vector<1x16xbf16>, vector<2x16xbf16>, vector<1x2xf32> -> vector<1x2xf32>
    %c0_81 = arith.constant 0 : index
    %c0_82 = arith.constant 0 : index
    %210 = vector.load %arg14[%c0_81, %c0_82] : memref<1x1xf32, #tpu.memory_space<vmem>>, vector<1x1xf32>
    %211 = vector.broadcast %210 : vector<1x1xf32> to vector<1x2xf32>
    %212 = arith.addf %209, %211 : vector<1x2xf32>
    %213 = arith.negf %212 : vector<1x2xf32>
    %214 = math.exp %213 : vector<1x2xf32>
    %cst_83 = arith.constant 1.000000e+00 : f32
    %215 = vector.broadcast %cst_83 : f32 to vector<1x2xf32>
    %216 = arith.addf %215, %214 : vector<1x2xf32>
    %217 = arith.divf %215, %216 : vector<1x2xf32>
    %c0_84 = arith.constant 0 : index
    %c0_85 = arith.constant 0 : index
    %c0_86 = arith.constant 0 : index
    %218 = vector.load %arg15[%c0_84, %c0_85, %c0_86] : memref<1x1x2xf32, #tpu.memory_space<vmem>>, vector<1x1x2xf32>
    %219 = vector.shape_cast %218 : vector<1x1x2xf32> to vector<1x2xf32>
    %220 = vector.shape_cast %217 : vector<1x2xf32> to vector<1x1x2xf32>
    tpu.vector_store %arg15[%c0_84, %c0_85, %c0_86], %220 {strides = array<i32>} : memref<1x1x2xf32, #tpu.memory_space<vmem>>, vector<1x1x2xf32>,
    return
  }
  func.func @transform_0(%arg0: i32, %arg1: i32, %arg2: memref<3xi32, #tpu.memory_space<smem>>) -> (i32, i32, i32) {
    %c0_i32 = arith.constant 0 : i32
    %c0_i32_0 = arith.constant 0 : i32
    %c0_i32_1 = arith.constant 0 : i32
    return %arg1, %c0_i32, %c0_i32_0 : i32, i32, i32
  }
  func.func @transform_1(%arg0: i32, %arg1: i32, %arg2: memref<3xi32, #tpu.memory_space<smem>>) -> (i32, i32, i32) {
    %c0_i32 = arith.constant 0 : i32
    %c0_i32_0 = arith.constant 0 : i32
    %c0_i32_1 = arith.constant 0 : i32
    return %arg0, %c0_i32, %c0_i32_0 : i32, i32, i32
  }
  func.func @transform_2(%arg0: i32, %arg1: i32, %arg2: memref<3xi32, #tpu.memory_space<smem>>) -> (i32, i32) {
    %c0_i32 = arith.constant 0 : i32
    %c0_i32_0 = arith.constant 0 : i32
    %c0_i32_1 = arith.constant 0 : i32
    return %c0_i32, %c0_i32_0 : i32, i32
  }
  func.func @transform_3(%arg0: i32, %arg1: i32, %arg2: memref<3xi32, #tpu.memory_space<smem>>) -> (i32, i32) {
    %c0_i32 = arith.constant 0 : i32
    %c0_i32_0 = arith.constant 0 : i32
    %c0_i32_1 = arith.constant 0 : i32
    return %c0_i32, %c0_i32_0 : i32, i32
  }
  func.func @transform_4(%arg0: i32, %arg1: i32, %arg2: memref<3xi32, #tpu.memory_space<smem>>) -> (i32, i32, i32) {
    %c0_i32 = arith.constant 0 : i32
    %c0_i32_0 = arith.constant 0 : i32
    %c0_i32_1 = arith.constant 0 : i32
    %c0_i32_2 = arith.constant 0 : i32
    return %c0_i32, %c0_i32_0, %c0_i32_1 : i32, i32, i32
  }
  func.func @transform_5(%arg0: i32, %arg1: i32, %arg2: memref<3xi32, #tpu.memory_space<smem>>) -> (i32, i32, i32) {
    %c0_i32 = arith.constant 0 : i32
    %c0_i32_0 = arith.constant 0 : i32
    %c0_i32_1 = arith.constant 0 : i32
    %c0_i32_2 = arith.constant 0 : i32
    return %c0_i32, %c0_i32_0, %c0_i32_1 : i32, i32, i32
  }
  func.func @transform_6(%arg0: i32, %arg1: i32, %arg2: memref<3xi32, #tpu.memory_space<smem>>) -> (i32, i32, i32) {
    %c0_i32 = arith.constant 0 : i32
    %c0_i32_0 = arith.constant 0 : i32
    %c0_i32_1 = arith.constant 0 : i32
    %c0_i32_2 = arith.constant 0 : i32
    return %c0_i32, %c0_i32_0, %c0_i32_1 : i32, i32, i32
  }
  func.func @transform_7(%arg0: i32, %arg1: i32, %arg2: memref<3xi32, #tpu.memory_space<smem>>) -> (i32, i32, i32) {
    %c0_i32 = arith.constant 0 : i32
    %c0_i32_0 = arith.constant 0 : i32
    %c0_i32_1 = arith.constant 0 : i32
    %c0_i32_2 = arith.constant 0 : i32
    return %c0_i32, %c0_i32_0, %c0_i32_1 : i32, i32, i32
  }
  func.func @transform_8(%arg0: i32, %arg1: i32, %arg2: memref<3xi32, #tpu.memory_space<smem>>) -> (i32, i32, i32) {
    %c0_i32 = arith.constant 0 : i32
    %c0_i32_0 = arith.constant 0 : i32
    %c0_i32_1 = arith.constant 0 : i32
    %c0_i32_2 = arith.constant 0 : i32
    return %c0_i32, %c0_i32_0, %c0_i32_1 : i32, i32, i32
  }
  func.func @transform_9(%arg0: i32, %arg1: i32, %arg2: memref<3xi32, #tpu.memory_space<smem>>) -> (i32, i32, i32) {
    %c0_i32 = arith.constant 0 : i32
    %c0_i32_0 = arith.constant 0 : i32
    %c0_i32_1 = arith.constant 0 : i32
    %c0_i32_2 = arith.constant 0 : i32
    return %c0_i32, %c0_i32_0, %c0_i32_1 : i32, i32, i32
  }
  func.func @transform_10(%arg0: i32, %arg1: i32, %arg2: memref<3xi32, #tpu.memory_space<smem>>) -> (i32, i32) {
    %c0_i32 = arith.constant 0 : i32
    %c0_i32_0 = arith.constant 0 : i32
    %c0_i32_1 = arith.constant 0 : i32
    return %c0_i32, %c0_i32_0 : i32, i32
  }
  func.func @transform_11(%arg0: i32, %arg1: i32, %arg2: memref<3xi32, #tpu.memory_space<smem>>) -> (i32, i32) {
    %c0_i32 = arith.constant 0 : i32
    %c0_i32_0 = arith.constant 0 : i32
    %c0_i32_1 = arith.constant 0 : i32
    return %c0_i32, %c0_i32_0 : i32, i32
  }
  func.func @transform_12(%arg0: i32, %arg1: i32, %arg2: memref<3xi32, #tpu.memory_space<smem>>) -> (i32, i32, i32) {
    %c1_i32 = arith.constant 1 : i32
    %0 = arith.muli %arg1, %c1_i32 : i32
    %1 = arith.addi %0, %arg0 : i32
    %c0_i32 = arith.constant 0 : i32
    %c0_i32_0 = arith.constant 0 : i32
    %c0_i32_1 = arith.constant 0 : i32
    return %1, %c0_i32, %c0_i32_0 : i32, i32, i32
  }
}

</mosaic_0001>

<llo_original>
// kernel: tpu_custom_call.1
$region0: #{tpu_custom_call.1}
  #allocation0 [shape = 'u32[]', space=smem, size = 0x4, offset = 0x4, fixed_abs, tag = 'smem constant byte address 0x4 - core index']
  #allocation1 [shape = 'u32[144,128]{1,0:T(1,128)}', space=vmem, size = 0x12000, scoped, tag = 'internal scratch']
  #allocation2 [shape = 's32[1]{0}', space=sflag, size = 0x4, scoped, tag = 'scoped memory for tpu_custom_call.1']
  #allocation3 [shape = 'u8[512]{0}', space=smem, size = 0x200, scoped, tag = 'prefetched SMEM operand 0']
  #allocation4 [shape = 'f32[1,1]{1,0:T(1,128)S(1)}', space=vmem, size = 0x200, scoped, tag = 'scoped memory for tpu_custom_call.1']
  %s0 = inlined_call_operand.hbm [shape: s32[3], index: 0, kind: input, shape index: {}]
  %s1 = inlined_call_operand.vmem [shape: f32[3,8,32], index: 1, kind: input, shape index: {}]
  %s2 = inlined_call_operand.hbm [shape: bf16[2,16,32], index: 2, kind: input, shape index: {}]
  %s3 = inlined_call_operand.vmem [shape: bf16[32,16], index: 3, kind: input, shape index: {}]
  %s4 = inlined_call_operand.hbm [shape: f32[1,16], index: 4, kind: input, shape index: {}]
  %s5 = inlined_call_operand.vmem [shape: bf16[2,16,16], index: 5, kind: input, shape index: {}]
  %s6 = inlined_call_operand.vmem [shape: f32[2,1,16], index: 6, kind: input, shape index: {}]
  %s7 = inlined_call_operand.vmem [shape: bf16[2,16,16], index: 7, kind: input, shape index: {}]
  %s8 = inlined_call_operand.vmem [shape: f32[2,1,16], index: 8, kind: input, shape index: {}]
  %s9 = inlined_call_operand.vmem [shape: f32[2,1,16], index: 9, kind: input, shape index: {}]
  %s10 = inlined_call_operand.vmem [shape: f32[2,1,1], index: 10, kind: input, shape index: {}]
  %s11 = inlined_call_operand.vmem [shape: bf16[1,16], index: 11, kind: input, shape index: {}]
  %s12 = inlined_call_operand.<no memory space> [shape: f32[1,1], index: 12, kind: input, shape index: {}]
  %s13 = inlined_call_operand.vmem [shape: f32[3,1,2], index: 13, kind: output, shape index: {}]
  %s14 = sld [smem:[#allocation0]]
  $region89: #{tpu_custom_call.1} parent=0
    _
  %s16 = ssub.s32 1, %s14
  %s17 = scalar_select 0, %s16, %s14
  %19 = dma.hbm_to_smem %s0, 16, [#allocation3], [#allocation2]
  %v20 = vstv %s12
  %21 = vst [vmem:[#allocation4] sm:$0x1] %v20
  %22 = dma.done [#allocation2], 16
  %23 = sfence
  $region1: #{tpu_custom_call.1} parent=0
    #allocation5 [shape = 'u8[8192]{0}', space=vmem, size = 0x2000, scoped, tag = 'input window, operand 2, single buffered']
    #allocation6 [shape = 's32[2]{0}', space=sflag, size = 0x8, scoped, tag = 'scoped memory for tpu_custom_call.1']
    #allocation7 [shape = 'u8[512]{0}', space=vmem, size = 0x400, scoped, tag = 'input window, operand 4, single buffered']
    #allocation8 [shape = 's32[1]{0}', space=sflag, size = 0x4, scoped, tag = 'scoped memory for tpu_custom_call.1']
    %24 = vsyncpa [#allocation6], 0
    %25 = vsyncpa [#allocation8], 0
    loop: start=0, step=1, limit=5
    $region2: #{tpu_custom_call.1} parent=1 // loop_pre_header
      _
    $region3: #{tpu_custom_call.1} parent=1 // loop_header
      %s27 = sphi 0, %s31
      %p28 = scmp.ge.s32.totalorder %s27, 5
      %s34 = sphi 0, %s46
      %s35 = sphi 0, %s42
      %s36 = sphi 0, %s34
      %s37 = sphi 0, %s35
      %s38 = sphi 0, %s36
      %s39 = sphi 0, %s37
      %s49 = sphi 0, %s51
      %s52 = sphi 0, %s49
      %s53 = sphi 0, %s52
      %s69 = sphi 0, %s53
      %s75 = sphi 0, %s77
      %s78 = sphi 0, %s75
      %s79 = sphi 0, %s78
      %s95 = sphi 0, %s79
      %s99 = sphi 0, %s99
      %s101 = sphi 0, %s99
      %s102 = sphi 0, %s101
      %s116 = sphi 0, %s102
      %s120 = sphi 0, %s120
      %s122 = sphi 0, %s120
      %s123 = sphi 0, %s122
      %s137 = sphi 0, %s123
      %s141 = sphi 0, %s141
      %s143 = sphi 0, %s141
      %s144 = sphi 0, %s143
      %s158 = sphi 0, %s144
      %s162 = sphi 0, %s162
      %s164 = sphi 0, %s162
      %s165 = sphi 0, %s164
      %s179 = sphi 0, %s165
      %s183 = sphi 0, %s183
      %s185 = sphi 0, %s183
      %s186 = sphi 0, %s185
      %s200 = sphi 0, %s186
      %s204 = sphi 0, %s204
      %s206 = sphi 0, %s204
      %s207 = sphi 0, %s206
      %s221 = sphi 0, %s207
      %s225 = sphi 0, %s225
      %s227 = sphi 0, %s225
      %s228 = sphi 0, %s227
      %s242 = sphi 0, %s228
      %s246 = sphi 0, %s246
      %s248 = sphi 0, %s246
      %s249 = sphi 0, %s248
      %s263 = sphi 0, %s249
      %s267 = sphi 0, %s267
      %s269 = sphi 0, %s267
      %s270 = sphi 0, %s269
      %s284 = sphi 0, %s270
      %s288 = sphi 0, %s288
      %s290 = sphi 0, %s288
      %s291 = sphi 0, %s290
      %s305 = sphi 0, %s291
      %s313 = sphi 0, %s315
      %s316 = sphi 0, %s313
      %s317 = sphi 0, %s316
      %s333 = sphi 0, %s317
    $region4: #{tpu_custom_call.1} parent=1 // loop_header_branch
      %30 = sbr.rel (%p28) target = $region8
    $region5: #{tpu_custom_call.1} parent=1 // loop_body
      %s32 = ssub.s32 %s27, 1
      %s33 = ssub.s32 %s27, 2
      %s40 = sadd.s32 1, %s35
      %p41 = scmp.ge.s32.totalorder %s40, 3
      %s42 = scalar_select %p41, 0, %s40
      %s43 = sadd.s32 1, %s34
      %s44 = scalar_select %p41, %s43, %s34
      %p45 = scmp.ge.s32.totalorder %s44, 1
      %s46 = scalar_select %p45, 0, %s44
      %s47 = ssub.s32 %s35, %s42
      %p48 = scmp.eq.s32.totalorder %s47, 0
      %s50 = sadd.s32 %s49, 1
      %s51 = scalar_select %p48, %s49, %s50
      %p54 = pneg %p48
      %p55 = scmp.eq.s32.totalorder %s27, 2
      %p56 = por %p54, %p55
      %p57 = scmp.ne.s32.totalorder %s49, %s52
      %p58 = scmp.eq.s32.totalorder %s27, 0
      %p59 = por %p57, %p58
      %p60 = scmp.ne.s32.totalorder %s49, %s52
      %p61 = scmp.eq.s32.totalorder %s32, 2
      %p62 = por %p60, %p61
      %p63 = scmp.ne.s32.totalorder %s52, %s53
      %p64 = scmp.eq.s32.totalorder %s32, 0
      %p65 = por %p63, %p64
      %p66 = scmp.ne.s32.totalorder %s52, %s53
      %p67 = scmp.eq.s32.totalorder %s33, 2
      %p68 = por %p66, %p67
      %p70 = scmp.ne.s32.totalorder %s53, %s69
      %p71 = scmp.eq.s32.totalorder %s33, 0
      %p72 = por %p70, %p71
      %s73 = ssub.s32 %s34, %s46
      %p74 = scmp.eq.s32.totalorder %s73, 0
      %s76 = sadd.s32 %s75, 1
      %s77 = scalar_select %p74, %s75, %s76
      %p80 = pneg %p74
      %p81 = scmp.eq.s32.totalorder %s27, 2
      %p82 = por %p80, %p81
      %p83 = scmp.ne.s32.totalorder %s75, %s78
      %p84 = scmp.eq.s32.totalorder %s27, 0
      %p85 = por %p83, %p84
      %p86 = scmp.ne.s32.totalorder %s75, %s78
      %p87 = scmp.eq.s32.totalorder %s32, 2
      %p88 = por %p86, %p87
      %p89 = scmp.ne.s32.totalorder %s78, %s79
      %p90 = scmp.eq.s32.totalorder %s32, 0
      %p91 = por %p89, %p90
      %p92 = scmp.ne.s32.totalorder %s78, %s79
      %p93 = scmp.eq.s32.totalorder %s33, 2
      %p94 = por %p92, %p93
      %p96 = scmp.ne.s32.totalorder %s79, %s95
      %p97 = scmp.eq.s32.totalorder %s33, 0
      %p98 = por %p96, %p97
      %s100 = sadd.s32 %s99, 1
      %p103 = scmp.eq.s32.totalorder %s27, 2
      %p104 = scmp.ne.s32.totalorder %s99, %s101
      %p105 = scmp.eq.s32.totalorder %s27, 0
      %p106 = por %p104, %p105
      %p107 = scmp.ne.s32.totalorder %s99, %s101
      %p108 = scmp.eq.s32.totalorder %s32, 2
      %p109 = por %p107, %p108
      %p110 = scmp.ne.s32.totalorder %s101, %s102
      %p111 = scmp.eq.s32.totalorder %s32, 0
      %p112 = por %p110, %p111
      %p113 = scmp.ne.s32.totalorder %s101, %s102
      %p114 = scmp.eq.s32.totalorder %s33, 2
      %p115 = por %p113, %p114
      %p117 = scmp.ne.s32.totalorder %s102, %s116
      %p118 = scmp.eq.s32.totalorder %s33, 0
      %p119 = por %p117, %p118
      %s121 = sadd.s32 %s120, 1
      %p124 = scmp.eq.s32.totalorder %s27, 2
      %p125 = scmp.ne.s32.totalorder %s120, %s122
      %p126 = scmp.eq.s32.totalorder %s27, 0
      %p127 = por %p125, %p126
      %p128 = scmp.ne.s32.totalorder %s120, %s122
      %p129 = scmp.eq.s32.totalorder %s32, 2
      %p130 = por %p128, %p129
      %p131 = scmp.ne.s32.totalorder %s122, %s123
      %p132 = scmp.eq.s32.totalorder %s32, 0
      %p133 = por %p131, %p132
      %p134 = scmp.ne.s32.totalorder %s122, %s123
      %p135 = scmp.eq.s32.totalorder %s33, 2
      %p136 = por %p134, %p135
      %p138 = scmp.ne.s32.totalorder %s123, %s137
      %p139 = scmp.eq.s32.totalorder %s33, 0
      %p140 = por %p138, %p139
      %s142 = sadd.s32 %s141, 1
      %p145 = scmp.eq.s32.totalorder %s27, 2
      %p146 = scmp.ne.s32.totalorder %s141, %s143
      %p147 = scmp.eq.s32.totalorder %s27, 0
      %p148 = por %p146, %p147
      %p149 = scmp.ne.s32.totalorder %s141, %s143
      %p150 = scmp.eq.s32.totalorder %s32, 2
      %p151 = por %p149, %p150
      %p152 = scmp.ne.s32.totalorder %s143, %s144
      %p153 = scmp.eq.s32.totalorder %s32, 0
      %p154 = por %p152, %p153
      %p155 = scmp.ne.s32.totalorder %s143, %s144
      %p156 = scmp.eq.s32.totalorder %s33, 2
      %p157 = por %p155, %p156
      %p159 = scmp.ne.s32.totalorder %s144, %s158
      %p160 = scmp.eq.s32.totalorder %s33, 0
      %p161 = por %p159, %p160
      %s163 = sadd.s32 %s162, 1
      %p166 = scmp.eq.s32.totalorder %s27, 2
      %p167 = scmp.ne.s32.totalorder %s162, %s164
      %p168 = scmp.eq.s32.totalorder %s27, 0
      %p169 = por %p167, %p168
      %p170 = scmp.ne.s32.totalorder %s162, %s164
      %p171 = scmp.eq.s32.totalorder %s32, 2
      %p172 = por %p170, %p171
      %p173 = scmp.ne.s32.totalorder %s164, %s165
      %p174 = scmp.eq.s32.totalorder %s32, 0
      %p175 = por %p173, %p174
      %p176 = scmp.ne.s32.totalorder %s164, %s165
      %p177 = scmp.eq.s32.totalorder %s33, 2
      %p178 = por %p176, %p177
      %p180 = scmp.ne.s32.totalorder %s165, %s179
      %p181 = scmp.eq.s32.totalorder %s33, 0
      %p182 = por %p180, %p181
      %s184 = sadd.s32 %s183, 1
      %p187 = scmp.eq.s32.totalorder %s27, 2
      %p188 = scmp.ne.s32.totalorder %s183, %s185
      %p189 = scmp.eq.s32.totalorder %s27, 0
      %p190 = por %p188, %p189
      %p191 = scmp.ne.s32.totalorder %s183, %s185
      %p192 = scmp.eq.s32.totalorder %s32, 2
      %p193 = por %p191, %p192
      %p194 = scmp.ne.s32.totalorder %s185, %s186
      %p195 = scmp.eq.s32.totalorder %s32, 0
      %p196 = por %p194, %p195
      %p197 = scmp.ne.s32.totalorder %s185, %s186
      %p198 = scmp.eq.s32.totalorder %s33, 2
      %p199 = por %p197, %p198
      %p201 = scmp.ne.s32.totalorder %s186, %s200
      %p202 = scmp.eq.s32.totalorder %s33, 0
      %p203 = por %p201, %p202
      %s205 = sadd.s32 %s204, 1
      %p208 = scmp.eq.s32.totalorder %s27, 2
      %p209 = scmp.ne.s32.totalorder %s204, %s206
      %p210 = scmp.eq.s32.totalorder %s27, 0
      %p211 = por %p209, %p210
      %p212 = scmp.ne.s32.totalorder %s204, %s206
      %p213 = scmp.eq.s32.totalorder %s32, 2
      %p214 = por %p212, %p213
      %p215 = scmp.ne.s32.totalorder %s206, %s207
      %p216 = scmp.eq.s32.totalorder %s32, 0
      %p217 = por %p215, %p216
      %p218 = scmp.ne.s32.totalorder %s206, %s207
      %p219 = scmp.eq.s32.totalorder %s33, 2
      %p220 = por %p218, %p219
      %p222 = scmp.ne.s32.totalorder %s207, %s221
      %p223 = scmp.eq.s32.totalorder %s33, 0
      %p224 = por %p222, %p223
      %s226 = sadd.s32 %s225, 1
      %p229 = scmp.eq.s32.totalorder %s27, 2
      %p230 = scmp.ne.s32.totalorder %s225, %s227
      %p231 = scmp.eq.s32.totalorder %s27, 0
      %p232 = por %p230, %p231
      %p233 = scmp.ne.s32.totalorder %s225, %s227
      %p234 = scmp.eq.s32.totalorder %s32, 2
      %p235 = por %p233, %p234
      %p236 = scmp.ne.s32.totalorder %s227, %s228
      %p237 = scmp.eq.s32.totalorder %s32, 0
      %p238 = por %p236, %p237
      %p239 = scmp.ne.s32.totalorder %s227, %s228
      %p240 = scmp.eq.s32.totalorder %s33, 2
      %p241 = por %p239, %p240
      %p243 = scmp.ne.s32.totalorder %s228, %s242
      %p244 = scmp.eq.s32.totalorder %s33, 0
      %p245 = por %p243, %p244
      %s247 = sadd.s32 %s246, 1
      %p250 = scmp.eq.s32.totalorder %s27, 2
      %p251 = scmp.ne.s32.totalorder %s246, %s248
      %p252 = scmp.eq.s32.totalorder %s27, 0
      %p253 = por %p251, %p252
      %p254 = scmp.ne.s32.totalorder %s246, %s248
      %p255 = scmp.eq.s32.totalorder %s32, 2
      %p256 = por %p254, %p255
      %p257 = scmp.ne.s32.totalorder %s248, %s249
      %p258 = scmp.eq.s32.totalorder %s32, 0
      %p259 = por %p257, %p258
      %p260 = scmp.ne.s32.totalorder %s248, %s249
      %p261 = scmp.eq.s32.totalorder %s33, 2
      %p262 = por %p260, %p261
      %p264 = scmp.ne.s32.totalorder %s249, %s263
      %p265 = scmp.eq.s32.totalorder %s33, 0
      %p266 = por %p264, %p265
      %s268 = sadd.s32 %s267, 1
      %p271 = scmp.eq.s32.totalorder %s27, 2
      %p272 = scmp.ne.s32.totalorder %s267, %s269
      %p273 = scmp.eq.s32.totalorder %s27, 0
      %p274 = por %p272, %p273
      %p275 = scmp.ne.s32.totalorder %s267, %s269
      %p276 = scmp.eq.s32.totalorder %s32, 2
      %p277 = por %p275, %p276
      %p278 = scmp.ne.s32.totalorder %s269, %s270
      %p279 = scmp.eq.s32.totalorder %s32, 0
      %p280 = por %p278, %p279
      %p281 = scmp.ne.s32.totalorder %s269, %s270
      %p282 = scmp.eq.s32.totalorder %s33, 2
      %p283 = por %p281, %p282
      %p285 = scmp.ne.s32.totalorder %s270, %s284
      %p286 = scmp.eq.s32.totalorder %s33, 0
      %p287 = por %p285, %p286
      %s289 = sadd.s32 %s288, 1
      %p292 = scmp.eq.s32.totalorder %s27, 2
      %p293 = scmp.ne.s32.totalorder %s288, %s290
      %p294 = scmp.eq.s32.totalorder %s27, 0
      %p295 = por %p293, %p294
      %p296 = scmp.ne.s32.totalorder %s288, %s290
      %p297 = scmp.eq.s32.totalorder %s32, 2
      %p298 = por %p296, %p297
      %p299 = scmp.ne.s32.totalorder %s290, %s291
      %p300 = scmp.eq.s32.totalorder %s32, 0
      %p301 = por %p299, %p300
      %p302 = scmp.ne.s32.totalorder %s290, %s291
      %p303 = scmp.eq.s32.totalorder %s33, 2
      %p304 = por %p302, %p303
      %p306 = scmp.ne.s32.totalorder %s291, %s305
      %p307 = scmp.eq.s32.totalorder %s33, 0
      %p308 = por %p306, %p307
      %s309 = sadd.s32 %s35, %s34
      %s310 = sadd.s32 %s42, %s46
      %s311 = ssub.s32 %s309, %s310
      %p312 = scmp.eq.s32.totalorder %s311, 0
      %s314 = sadd.s32 %s313, 1
      %s315 = scalar_select %p312, %s313, %s314
      %p318 = pneg %p312
      %p319 = scmp.eq.s32.totalorder %s27, 2
      %p320 = por %p318, %p319
      %p321 = scmp.ne.s32.totalorder %s313, %s316
      %p322 = scmp.eq.s32.totalorder %s27, 0
      %p323 = por %p321, %p322
      %p324 = scmp.ne.s32.totalorder %s313, %s316
      %p325 = scmp.eq.s32.totalorder %s32, 2
      %p326 = por %p324, %p325
      %p327 = scmp.ne.s32.totalorder %s316, %s317
      %p328 = scmp.eq.s32.totalorder %s32, 0
      %p329 = por %p327, %p328
      %p330 = scmp.ne.s32.totalorder %s316, %s317
      %p331 = scmp.eq.s32.totalorder %s33, 2
      %p332 = por %p330, %p331
      %p334 = scmp.ne.s32.totalorder %s317, %s333
      %p335 = scmp.eq.s32.totalorder %s33, 0
      %p336 = por %p334, %p335
      %p337 = scmp.le.s32.totalorder 1, %s27
      %p338 = scmp.lt.s32.totalorder %s27, 4
      %p339 = pnand %p337, %p338
      %p340 = pneg %p339
      // Predicated region
      $region9: #{tpu_custom_call.1} parent=5 // pred_check
        _
      $region10: #{tpu_custom_call.1} parent=5 // pred_check_branch
        %342 = sbr.rel (%p339) target = $region12
      $region11: #{tpu_custom_call.1} parent=5 // pred_region
        %s343 = ssub.s32 %s27, 1
        // Predicated region
        $region13: #{tpu_custom_call.1} parent=11 // pred_check
          %p344 = pneg %p91
        $region14: #{tpu_custom_call.1} parent=11 // pred_check_branch
          %346 = sbr.rel (%p344) target = $region16
        $region15: #{tpu_custom_call.1} parent=11 // pred_region
          %s347 = smul.u32 2, %s36
          %s349 = ssub.s32 256, 256
          %350 = vsyncadd [#allocation6], %s349
          %s351 = smul.addr %s347, 2
          %s352 = smul.addr %s351, 64
          %s353 = scalar_lea.hbm %s2, %s352
          %s354 = sshll.u32 [#allocation5], 4
          %s355 = int_to_ptr.vmem [resolvable:$true] %s354
          %360 = dma.hbm_to_vmem [thread:$0]  %s353, 256, %s355, [#allocation6], 64, 64, 4
        $region16: #{tpu_custom_call.1} parent=11 // pred_fallthru
          _
        // Predicated region
        $region17: #{tpu_custom_call.1} parent=11 // pred_check
          %p361 = pneg %p112
        $region18: #{tpu_custom_call.1} parent=11 // pred_check_branch
          %363 = sbr.rel (%p361) target = $region20
        $region19: #{tpu_custom_call.1} parent=11 // pred_region
          _
        $region20: #{tpu_custom_call.1} parent=11 // pred_fallthru
          _
        // Predicated region
        $region21: #{tpu_custom_call.1} parent=11 // pred_check
          %p364 = pneg %p133
        $region22: #{tpu_custom_call.1} parent=11 // pred_check_branch
          %366 = sbr.rel (%p364) target = $region24
        $region23: #{tpu_custom_call.1} parent=11 // pred_region
          %s368 = ssub.s32 16, 16
          %369 = vsyncadd [#allocation8], %s368
          %s371 = sshll.u32 [#allocation7], 4
          %s372 = int_to_ptr.vmem [resolvable:$true] %s371
          %374 = dma.hbm_to_vmem [thread:$0]  %s4, 16, %s372, [#allocation8]
        $region24: #{tpu_custom_call.1} parent=11 // pred_fallthru
          _
        // Predicated region
        $region25: #{tpu_custom_call.1} parent=11 // pred_check
          %p375 = pneg %p154
        $region26: #{tpu_custom_call.1} parent=11 // pred_check_branch
          %377 = sbr.rel (%p375) target = $region28
        $region27: #{tpu_custom_call.1} parent=11 // pred_region
          _
        $region28: #{tpu_custom_call.1} parent=11 // pred_fallthru
          _
        // Predicated region
        $region29: #{tpu_custom_call.1} parent=11 // pred_check
          %p378 = pneg %p175
        $region30: #{tpu_custom_call.1} parent=11 // pred_check_branch
          %380 = sbr.rel (%p378) target = $region32
        $region31: #{tpu_custom_call.1} parent=11 // pred_region
          _
        $region32: #{tpu_custom_call.1} parent=11 // pred_fallthru
          _
        // Predicated region
        $region33: #{tpu_custom_call.1} parent=11 // pred_check
          %p381 = pneg %p196
        $region34: #{tpu_custom_call.1} parent=11 // pred_check_branch
          %383 = sbr.rel (%p381) target = $region36
        $region35: #{tpu_custom_call.1} parent=11 // pred_region
          _
        $region36: #{tpu_custom_call.1} parent=11 // pred_fallthru
          _
        // Predicated region
        $region37: #{tpu_custom_call.1} parent=11 // pred_check
          %p384 = pneg %p217
        $region38: #{tpu_custom_call.1} parent=11 // pred_check_branch
          %386 = sbr.rel (%p384) target = $region40
        $region39: #{tpu_custom_call.1} parent=11 // pred_region
          _
        $region40: #{tpu_custom_call.1} parent=11 // pred_fallthru
          _
        // Predicated region
        $region41: #{tpu_custom_call.1} parent=11 // pred_check
          %p387 = pneg %p238
        $region42: #{tpu_custom_call.1} parent=11 // pred_check_branch
          %389 = sbr.rel (%p387) target = $region44
        $region43: #{tpu_custom_call.1} parent=11 // pred_region
          _
        $region44: #{tpu_custom_call.1} parent=11 // pred_fallthru
          _
        // Predicated region
        $region45: #{tpu_custom_call.1} parent=11 // pred_check
          %p390 = pneg %p259
        $region46: #{tpu_custom_call.1} parent=11 // pred_check_branch
          %392 = sbr.rel (%p390) target = $region48
        $region47: #{tpu_custom_call.1} parent=11 // pred_region
          _
        $region48: #{tpu_custom_call.1} parent=11 // pred_fallthru
          _
        // Predicated region
        $region49: #{tpu_custom_call.1} parent=11 // pred_check
          %p393 = pneg %p280
        $region50: #{tpu_custom_call.1} parent=11 // pred_check_branch
          %395 = sbr.rel (%p393) target = $region52
        $region51: #{tpu_custom_call.1} parent=11 // pred_region
          _
        $region52: #{tpu_custom_call.1} parent=11 // pred_fallthru
          _
        // Predicated region
        $region53: #{tpu_custom_call.1} parent=11 // pred_check
          %p396 = pneg %p301
        $region54: #{tpu_custom_call.1} parent=11 // pred_check_branch
          %398 = sbr.rel (%p396) target = $region56
        $region55: #{tpu_custom_call.1} parent=11 // pred_region
          _
        $region56: #{tpu_custom_call.1} parent=11 // pred_fallthru
          _
      $region12: #{tpu_custom_call.1} parent=5 // pred_fallthru
        _
      %p399 = scmp.lt.s32.totalorder %s27, 3
      // Predicated region
      $region57: #{tpu_custom_call.1} parent=5 // pred_check
        %p400 = pneg %p399
      $region58: #{tpu_custom_call.1} parent=5 // pred_check_branch
        %402 = sbr.rel (%p400) target = $region60
      $region59: #{tpu_custom_call.1} parent=5 // pred_region
        // Predicated region
        $region61: #{tpu_custom_call.1} parent=59 // pred_check
          %p403 = pneg %p59
        $region62: #{tpu_custom_call.1} parent=59 // pred_check_branch
          %405 = sbr.rel (%p403) target = $region64
        $region63: #{tpu_custom_call.1} parent=59 // pred_region
          %p406 = scmp.lt.s32.totalorder %s35, 2
          %s407 = scalar_select %p406, %s35, 2
          %s408 = smul.addr %s407, 8
          %s409 = scalar_lea.vmem %s1, %s408
        $region64: #{tpu_custom_call.1} parent=59 // pred_fallthru
          _
      $region60: #{tpu_custom_call.1} parent=5 // pred_fallthru
        _
      %p410 = scmp.le.s32.totalorder 1, %s27
      %p411 = scmp.lt.s32.totalorder %s27, 4
      %p412 = pnand %p410, %p411
      %p413 = pneg %p412
      // Predicated region
      $region65: #{tpu_custom_call.1} parent=5 // pred_check
        _
      $region66: #{tpu_custom_call.1} parent=5 // pred_check_branch
        %415 = sbr.rel (%p412) target = $region68
      $region67: #{tpu_custom_call.1} parent=5 // pred_region
        %s416 = ssub.s32 %s27, 1
        // Predicated region
        $region69: #{tpu_custom_call.1} parent=67 // pred_check
          %p417 = pneg %p91
        $region70: #{tpu_custom_call.1} parent=67 // pred_check_branch
          %419 = sbr.rel (%p417) target = $region72
        $region71: #{tpu_custom_call.1} parent=67 // pred_region
          %420 = dma.done [#allocation6], 256
        $region72: #{tpu_custom_call.1} parent=67 // pred_fallthru
          _
        // Predicated region
        $region73: #{tpu_custom_call.1} parent=67 // pred_check
          %p421 = pneg %p133
        $region74: #{tpu_custom_call.1} parent=67 // pred_check_branch
          %423 = sbr.rel (%p421) target = $region76
        $region75: #{tpu_custom_call.1} parent=67 // pred_region
          %424 = dma.done [#allocation8], 16
        $region76: #{tpu_custom_call.1} parent=67 // pred_fallthru
          _
        %p425 = scmp.lt.s32.totalorder %s37, 2
        %s426 = scalar_select %p425, %s37, 2
        %s427 = smul.addr %s426, 8
        %s428 = scalar_lea.vmem %s1, %s427
        %p429 = pneg %p65
        %p430 = pneg %p62
        %p431 = pneg %p91
        %p432 = pneg %p88
        %p433 = pneg %p112
        %p434 = pneg %p109
        %p435 = pneg %p133
        %p436 = pneg %p130
        %p437 = pneg %p154
        %p438 = pneg %p151
        %p439 = pneg %p175
        %p440 = pneg %p172
        %p441 = pneg %p196
        %p442 = pneg %p193
        %p443 = pneg %p217
        %p444 = pneg %p214
        %p445 = pneg %p238
        %p446 = pneg %p235
        %p447 = pneg %p259
        %p448 = pneg %p256
        %p449 = pneg %p280
        %p450 = pneg %p277
        %p451 = pneg %p301
        %p452 = pneg %p298
        %p453 = pneg %p329
        %p454 = pneg %p326
        %s455 = sadd.s32 %s37, %s36
        %p456 = scmp.lt.s32.totalorder %s455, 2
        %s457 = scalar_select %p456, %s455, 2
        %s458 = scalar_lea.vmem %s13, %s457
        %p459 = scmp.lt.s32.totalorder %s37, 2
        %s460 = scalar_select %p459, %s37, 2
        %s461 = smul.addr %s460, 8
        %s462 = scalar_lea.vmem %s1, %s461
        %s463 = smul.u32 2, %s36
        %s464 = sadd.s32 %s37, %s36
        %p465 = scmp.lt.s32.totalorder %s464, 2
        %s466 = scalar_select %p465, %s464, 2
        %s467 = scalar_lea.vmem %s13, %s466
        %s468 = sadd.s32 %s37, %s36
        %s470 = sld [smem:[#allocation3 + %s37]]
        %v471 = vlaneseq
        %v472 = vshrl.u32 %v471, 7
        %v473 = vstv %s470
        %vm474 = vcmp.lt.s32.totalorder %v472, %v473
        %v475 = vsel %vm474, 1, 0
        %v476 = vcvt.s32.f32 %v475
        %v477 = vld [vmem:[%s462] sm:$0xff]
        %vm478 = vcmp.eq.s32.totalorder %v475, 1
        %v479 = vsel %vm478, %v477, 0.0
        %v480 = vpack.c.bf16 %v479, %v479
        %v481 = vld [vmem:[#allocation5] sm:$0xf]
        %v482 = vld [vmem:[#allocation5 + $0x4] sm:$0xf]
        %v483 = vld [vmem:[#allocation5 + $0x8] sm:$0xf]
        %v484 = vld [vmem:[#allocation5 + $0xc] sm:$0xf]
        %v487 = vunpack.c.l.b16 %v481
        %v488 = vunpack.c.l.b16 %v482
        %v489 = vpack.c.b16 %v488, %v487
        %vm490 = vcmask 261120
        %v492 = vsel %vm490, %v480, 0
        %v495 = vsel %vm490, %v489, 0
        %497 = vmatprep.subr.bf16.mxu0 0
        %498 = vmatpush1.bf16.xpose.msra.mxu0 %v495
        %499 = vmatprep.subr.bf16.mxu0 0
        %500 = vmatpush1.bf16.xpose.msra.mxu0 0
        %501 = vmatprep.subr.bf16.mxu0 0
        %502 = vmatpush1.bf16.xpose.msra.mxu0 0
        %503 = vmatprep.subr.bf16.mxu0 0
        %504 = vmatpush1.bf16.xpose.msra.mxu0 0
        %505 = vmatprep.subr.bf16.mxu0 0
        %506 = vmatpush1.bf16.xpose.msra.mxu0 0
        %507 = vmatprep.subr.bf16.mxu0 0
        %508 = vmatpush1.bf16.xpose.msra.mxu0 0
        %509 = vmatprep.subr.bf16.mxu0 0
        %510 = vmatpush1.bf16.xpose.msra.mxu0 0
        %511 = vmatprep.subr.bf16.mxu0 0
        %512 = vmatpush1.bf16.xpose.msra.mxu0 0
        %513 = vmatprep.subr.bf16.mxu0 0
        %514 = vmatpush1.bf16.xpose.msra.mxu0 0
        %515 = vmatprep.subr.bf16.mxu0 0
        %516 = vmatpush1.bf16.xpose.msra.mxu0 0
        %517 = vmatprep.subr.bf16.mxu0 0
        %518 = vmatpush1.bf16.xpose.msra.mxu0 0
        %519 = vmatprep.subr.bf16.mxu0 0
        %520 = vmatpush1.bf16.xpose.msra.mxu0 0
        %521 = vmatprep.subr.bf16.mxu0 0
        %522 = vmatpush1.bf16.xpose.msra.mxu0 0
        %523 = vmatprep.subr.bf16.mxu0 0
        %524 = vmatpush1.bf16.xpose.msra.mxu0 0
        %525 = vmatprep.subr.bf16.mxu0 0
        %526 = vmatpush1.bf16.xpose.msra.mxu0 0
        %527 = vmatprep.subr.bf16.mxu0 0
        %528 = vmatpush1.bf16.xpose.msra.mxu0 0
        %529 = vmatprep.mubr.bf16.mxu0 0
        %530 = vmatmul.mubr.bf16.gmra.mrb[0].mxu0 %v492
        %v531 = vpop.f32.mrb[0].mxu0
        %v532 = vadd.f32 0.0, %v531
        %v533 = vpop.f32.mrb[0].mxu0
        %v534 = vpop.f32.mrb[0].mxu0
        %v535 = vpop.f32.mrb[0].mxu0
        %536 = vdwg.mxu0
        %v539 = vunpack.c.l.b16 %v483
        %v540 = vunpack.c.l.b16 %v484
        %v541 = vpack.c.b16 %v540, %v539
        %v543 = vsel %vm490, %v541, 0
        %545 = vmatprep.subr.bf16.mxu0 0
        %546 = vmatpush1.bf16.xpose.msra.mxu0 %v543
        %547 = vmatprep.subr.bf16.mxu0 0
        %548 = vmatpush1.bf16.xpose.msra.mxu0 0
        %549 = vmatprep.subr.bf16.mxu0 0
        %550 = vmatpush1.bf16.xpose.msra.mxu0 0
        %551 = vmatprep.subr.bf16.mxu0 0
        %552 = vmatpush1.bf16.xpose.msra.mxu0 0
        %553 = vmatprep.subr.bf16.mxu0 0
        %554 = vmatpush1.bf16.xpose.msra.mxu0 0
        %555 = vmatprep.subr.bf16.mxu0 0
        %556 = vmatpush1.bf16.xpose.msra.mxu0 0
        %557 = vmatprep.subr.bf16.mxu0 0
        %558 = vmatpush1.bf16.xpose.msra.mxu0 0
        %559 = vmatprep.subr.bf16.mxu0 0
        %560 = vmatpush1.bf16.xpose.msra.mxu0 0
        %561 = vmatprep.subr.bf16.mxu0 0
        %562 = vmatpush1.bf16.xpose.msra.mxu0 0
        %563 = vmatprep.subr.bf16.mxu0 0
        %564 = vmatpush1.bf16.xpose.msra.mxu0 0
        %565 = vmatprep.subr.bf16.mxu0 0
        %566 = vmatpush1.bf16.xpose.msra.mxu0 0
        %567 = vmatprep.subr.bf16.mxu0 0
        %568 = vmatpush1.bf16.xpose.msra.mxu0 0
        %569 = vmatprep.subr.bf16.mxu0 0
        %570 = vmatpush1.bf16.xpose.msra.mxu0 0
        %571 = vmatprep.subr.bf16.mxu0 0
        %572 = vmatpush1.bf16.xpose.msra.mxu0 0
        %573 = vmatprep.subr.bf16.mxu0 0
        %574 = vmatpush1.bf16.xpose.msra.mxu0 0
        %575 = vmatprep.subr.bf16.mxu0 0
        %576 = vmatpush1.bf16.xpose.msra.mxu0 0
        %577 = vmatprep.mubr.bf16.mxu0 0
        %578 = vmatmul.mubr.bf16.gmra.mrb[0].mxu0 %v492
        %v579 = vpop.f32.mrb[0].mxu0
        %v580 = vadd.f32 0.0, %v579
        %v581 = vpop.f32.mrb[0].mxu0
        %v582 = vpop.f32.mrb[0].mxu0
        %v583 = vpop.f32.mrb[0].mxu0
        %584 = vdwg.mxu0
        %vm585 = vcmp.gt.f32.partialorder %v532, 0.0
        %vm586 = vcmp.gt.f32.partialorder %v580, 0.0
        %v587 = vmul.f32 %v532, 0.1
        %v588 = vmul.f32 %v580, 0.1
        %v589 = vsel %vm585, %v532, %v587
        %v590 = vsel %vm586, %v580, %v588
        %v591 = vmul.f32 %v589, %v589
        %v592 = vmul.f32 %v590, %v590
        %vm593 = vcmask 130048
        %v594 = vsel %vm593, %v591, 0.0
        %v595 = vrot.slane %v594, 4
        %v596 = vadd.f32 %v594, %v595
        %v597 = vrot.slane %v596, 2
        %v598 = vadd.f32 %v596, %v597
        %v599 = vrot.slane %v598, 1
        %v600 = vadd.f32 %v598, %v599
        %v601 = vsel %vm593, %v592, 0.0
        %v602 = vrot.slane %v601, 4
        %v603 = vadd.f32 %v601, %v602
        %v604 = vrot.slane %v603, 2
        %v605 = vadd.f32 %v603, %v604
        %v606 = vrot.slane %v605, 1
        %v607 = vadd.f32 %v605, %v606
        %v608 = vrsqrt.pop %v600
        %v609 = vmul.f32 %v600, %v608
        %vm610 = vcmp.eq.f32.partialorder %v600, inf
        %v611 = vsel %vm610, %v600, %v609
        %vm612 = vcmp.eq.f32.partialorder %v600, 0.0
        %v613 = vand.u32 %v600, 2147483648
        %v614 = vsel %vm612, %v613, %v611
        %v615 = vrsqrt.pop %v607
        %v616 = vmul.f32 %v607, %v615
        %vm617 = vcmp.eq.f32.partialorder %v607, inf
        %v618 = vsel %vm617, %v607, %v616
        %vm619 = vcmp.eq.f32.partialorder %v607, 0.0
        %v620 = vand.u32 %v607, 2147483648
        %v621 = vsel %vm619, %v620, %v618
        %v622 = vadd.f32 %v614, 1e-08
        %v623 = vadd.f32 %v621, 1e-08
        %v624 = vrcp.pop %v622
        %v625 = vrcp.pop %v623
        %v626 = vmul.f32 %v624, 9.0
        %v627 = vmul.f32 %v625, 9.0
        %v628 = vmul.f32 %v589, %v626
        %v629 = vmul.f32 %v590, %v627
        %v630 = vsel %vm593, %v628, -inf
        %631 = vmax.xlane.f32.xlu0 %v630
        %v632 = vpop.xlane.xlu0 %631
        %v633 = vsel %vm593, %v629, -inf
        %634 = vmax.xlane.f32.xlu0 %v633
        %v635 = vpop.xlane.xlu0 %634
        %v636 = vsub.f32 %v628, %v632
        %v637 = vsub.f32 %v629, %v635
        %v638 = vmul.f32 %v636, 1.442695
        %v639 = vpow.pop %v638
        %v640 = vmul.f32 %v637, 1.442695
        %v641 = vpow.pop %v640
        %v642 = vsel %vm593, %v639, 0.0
        %643 = vadd.xlane.f32.xlu0 %v642
        %v644 = vpop.xlane.xlu0 %643
        %v645 = vsel %vm593, %v641, 0.0
        %646 = vadd.xlane.f32.xlu0 %v645
        %v647 = vpop.xlane.xlu0 %646
        %v648 = vrcp.pop %v644
        %v649 = vrcp.pop %v647
        %v650 = vmul.f32 %v639, %v648
        %v651 = vmul.f32 %v641, %v649
        %v652 = vpack.c.bf16 %v650, %v650
        %v653 = vpack.c.bf16 %v651, %v651
        %v656 = vsel %vm593, %v652, 0
        %658 = vmatprep.subr.bf16.mxu0 0
        %659 = vmatpush1.bf16.msra.mxu0 %v489
        %660 = vmatprep.subr.bf16.mxu0 0
        %661 = vmatpush1.bf16.msra.mxu0 0
        %662 = vmatprep.subr.bf16.mxu0 0
        %663 = vmatpush1.bf16.msra.mxu0 0
        %664 = vmatprep.subr.bf16.mxu0 0
        %665 = vmatpush1.bf16.msra.mxu0 0
        %666 = vmatprep.subr.bf16.mxu0 0
        %667 = vmatpush1.bf16.msra.mxu0 0
        %668 = vmatprep.subr.bf16.mxu0 0
        %669 = vmatpush1.bf16.msra.mxu0 0
        %670 = vmatprep.subr.bf16.mxu0 0
        %671 = vmatpush1.bf16.msra.mxu0 0
        %672 = vmatprep.subr.bf16.mxu0 0
        %673 = vmatpush1.bf16.msra.mxu0 0
        %674 = vmatprep.subr.bf16.mxu0 0
        %675 = vmatpush1.bf16.msra.mxu0 0
        %676 = vmatprep.subr.bf16.mxu0 0
        %677 = vmatpush1.bf16.msra.mxu0 0
        %678 = vmatprep.subr.bf16.mxu0 0
        %679 = vmatpush1.bf16.msra.mxu0 0
        %680 = vmatprep.subr.bf16.mxu0 0
        %681 = vmatpush1.bf16.msra.mxu0 0
        %682 = vmatprep.subr.bf16.mxu0 0
        %683 = vmatpush1.bf16.msra.mxu0 0
        %684 = vmatprep.subr.bf16.mxu0 0
        %685 = vmatpush1.bf16.msra.mxu0 0
        %686 = vmatprep.subr.bf16.mxu0 0
        %687 = vmatpush1.bf16.msra.mxu0 0
        %688 = vmatprep.subr.bf16.mxu0 0
        %689 = vmatpush1.bf16.msra.mxu0 0
        %690 = vmatprep.mubr.bf16.mxu0 0
        %691 = vmatmul.mubr.bf16.gmra.mrb[0].mxu0 %v656
        %v692 = vpop.f32.mrb[0].mxu0
        %v693 = vadd.f32 0.0, %v692
        %v694 = vpop.f32.mrb[0].mxu0
        %v695 = vpop.f32.mrb[0].mxu0
        %v696 = vpop.f32.mrb[0].mxu0
        %697 = vdwg.mxu0
        %v700 = vsel %vm593, %v653, 0
        %702 = vmatprep.subr.bf16.mxu0 0
        %703 = vmatpush1.bf16.msra.mxu0 %v541
        %704 = vmatprep.subr.bf16.mxu0 0
        %705 = vmatpush1.bf16.msra.mxu0 0
        %706 = vmatprep.subr.bf16.mxu0 0
        %707 = vmatpush1.bf16.msra.mxu0 0
        %708 = vmatprep.subr.bf16.mxu0 0
        %709 = vmatpush1.bf16.msra.mxu0 0
        %710 = vmatprep.subr.bf16.mxu0 0
        %711 = vmatpush1.bf16.msra.mxu0 0
        %712 = vmatprep.subr.bf16.mxu0 0
        %713 = vmatpush1.bf16.msra.mxu0 0
        %714 = vmatprep.subr.bf16.mxu0 0
        %715 = vmatpush1.bf16.msra.mxu0 0
        %716 = vmatprep.subr.bf16.mxu0 0
        %717 = vmatpush1.bf16.msra.mxu0 0
        %718 = vmatprep.subr.bf16.mxu0 0
        %719 = vmatpush1.bf16.msra.mxu0 0
        %720 = vmatprep.subr.bf16.mxu0 0
        %721 = vmatpush1.bf16.msra.mxu0 0
        %722 = vmatprep.subr.bf16.mxu0 0
        %723 = vmatpush1.bf16.msra.mxu0 0
        %724 = vmatprep.subr.bf16.mxu0 0
        %725 = vmatpush1.bf16.msra.mxu0 0
        %726 = vmatprep.subr.bf16.mxu0 0
        %727 = vmatpush1.bf16.msra.mxu0 0
        %728 = vmatprep.subr.bf16.mxu0 0
        %729 = vmatpush1.bf16.msra.mxu0 0
        %730 = vmatprep.subr.bf16.mxu0 0
        %731 = vmatpush1.bf16.msra.mxu0 0
        %732 = vmatprep.subr.bf16.mxu0 0
        %733 = vmatpush1.bf16.msra.mxu0 0
        %734 = vmatprep.mubr.bf16.mxu0 0
        %735 = vmatmul.mubr.bf16.gmra.mrb[0].mxu0 %v700
        %v736 = vpop.f32.mrb[0].mxu0
        %v737 = vadd.f32 0.0, %v736
        %v738 = vpop.f32.mrb[0].mxu0
        %v739 = vpop.f32.mrb[0].mxu0
        %v740 = vpop.f32.mrb[0].mxu0
        %741 = vdwg.mxu0
        %v742 = vmul.f32 %v693, %v693
        %v743 = vmul.f32 %v737, %v737
        %v744 = vsel %vm490, %v742, 0.0
        %745 = vadd.xlane.f32.xlu0 %v744
        %v746 = vpop.xlane.xlu0 %745
        %v747 = vsel %vm490, %v743, 0.0
        %748 = vadd.xlane.f32.xlu0 %v747
        %v749 = vpop.xlane.xlu0 %748
        %v750 = vrsqrt.pop %v746
        %v751 = vmul.f32 %v746, %v750
        %vm752 = vcmp.eq.f32.partialorder %v746, inf
        %v753 = vsel %vm752, %v746, %v751
        %vm754 = vcmp.eq.f32.partialorder %v746, 0.0
        %v755 = vand.u32 %v746, 2147483648
        %v756 = vsel %vm754, %v755, %v753
        %v757 = vrsqrt.pop %v749
        %v758 = vmul.f32 %v749, %v757
        %vm759 = vcmp.eq.f32.partialorder %v749, inf
        %v760 = vsel %vm759, %v749, %v758
        %vm761 = vcmp.eq.f32.partialorder %v749, 0.0
        %v762 = vand.u32 %v749, 2147483648
        %v763 = vsel %vm761, %v762, %v760
        %v764 = vadd.f32 %v756, 1e-08
        %v765 = vadd.f32 %v763, 1e-08
        %v766 = vrcp.pop %v764
        %v767 = vrcp.pop %v765
        %v768 = vmul.f32 %v693, %v766
        %v769 = vmul.f32 %v737, %v767
        %v770 = vsub.f32 %v479, %v768
        %v771 = vsub.f32 %v479, %v769
        %v772 = vmul.f32 %v770, %v770
        %v773 = vmul.f32 %v771, %v771
        %v774 = vpack.c.bf16 %v772, %v772
        %v775 = vpack.c.bf16 %v773, %v773
        %v776 = vld [vmem:[%s3] sm:$0xf]
        %v777 = vld [vmem:[%s3 + $0x4] sm:$0xf]
        %v778 = vld [vmem:[%s3 + $0x8] sm:$0xf]
        %v779 = vld [vmem:[%s3 + $0xc] sm:$0xf]
        %v780 = vld [vmem:[#allocation7] sm:$0x1]
        %v782 = vlaneseq
        %v783 = vshrl.u32 %v782, 7
        %v784 = vsub.s32 0, %v783
        %v785 = vrot.slane %v780, %v784
        %v789 = vunpack.c.l.b16 %v774
        %v790 = vunpack.c.l.b16 %v775
        %v791 = vpack.c.b16 %v790, %v789
        %v796 = vunpack.c.l.b16 %v776
        %v797 = vunpack.c.l.b16 %v777
        %v798 = vunpack.c.l.b16 %v778
        %v799 = vunpack.c.l.b16 %v779
        %v800 = vpack.c.b16 %v797, %v796
        %v801 = vpack.c.b16 %v799, %v798
        %v805 = vsel %vm490, %v791, 0
        %807 = vmatprep.subr.bf16.mxu0 0
        %808 = vmatpush1.bf16.msra.mxu0 %v800
        %809 = vmatprep.subr.bf16.mxu0 0
        %810 = vmatpush1.bf16.msra.mxu0 %v801
        %811 = vmatprep.subr.bf16.mxu0 0
        %812 = vmatpush1.bf16.msra.mxu0 0
        %813 = vmatprep.subr.bf16.mxu0 0
        %814 = vmatpush1.bf16.msra.mxu0 0
        %815 = vmatprep.subr.bf16.mxu0 0
        %816 = vmatpush1.bf16.msra.mxu0 0
        %817 = vmatprep.subr.bf16.mxu0 0
        %818 = vmatpush1.bf16.msra.mxu0 0
        %819 = vmatprep.subr.bf16.mxu0 0
        %820 = vmatpush1.bf16.msra.mxu0 0
        %821 = vmatprep.subr.bf16.mxu0 0
        %822 = vmatpush1.bf16.msra.mxu0 0
        %823 = vmatprep.subr.bf16.mxu0 0
        %824 = vmatpush1.bf16.msra.mxu0 0
        %825 = vmatprep.subr.bf16.mxu0 0
        %826 = vmatpush1.bf16.msra.mxu0 0
        %827 = vmatprep.subr.bf16.mxu0 0
        %828 = vmatpush1.bf16.msra.mxu0 0
        %829 = vmatprep.subr.bf16.mxu0 0
        %830 = vmatpush1.bf16.msra.mxu0 0
        %831 = vmatprep.subr.bf16.mxu0 0
        %832 = vmatpush1.bf16.msra.mxu0 0
        %833 = vmatprep.subr.bf16.mxu0 0
        %834 = vmatpush1.bf16.msra.mxu0 0
        %835 = vmatprep.subr.bf16.mxu0 0
        %836 = vmatpush1.bf16.msra.mxu0 0
        %837 = vmatprep.subr.bf16.mxu0 0
        %838 = vmatpush1.bf16.msra.mxu0 0
        %839 = vmatprep.mubr.bf16.mxu0 0
        %840 = vmatmul.mubr.bf16.gmra.mrb[0].mxu0 %v805
        %v841 = vpop.f32.mrb[0].mxu0
        %v842 = vadd.f32 %v785, %v841
        %v843 = vpop.f32.mrb[0].mxu0
        %v844 = vpop.f32.mrb[0].mxu0
        %v845 = vadd.f32 %v785, %v844
        %v846 = vpop.f32.mrb[0].mxu0
        %847 = vdwg.mxu0
        %v848 = vmul.f32 %v842, %v842
        %v849 = vmul.f32 %v845, %v845
        %v850 = vsel %vm593, %v848, 0.0
        %851 = vadd.xlane.f32.xlu0 %v850
        %v852 = vpop.xlane.xlu0 %851
        %v853 = vsel %vm593, %v849, 0.0
        %854 = vadd.xlane.f32.xlu0 %v853
        %v855 = vpop.xlane.xlu0 %854
        %v856 = vrsqrt.pop %v852
        %v857 = vmul.f32 %v852, %v856
        %vm858 = vcmp.eq.f32.partialorder %v852, inf
        %v859 = vsel %vm858, %v852, %v857
        %vm860 = vcmp.eq.f32.partialorder %v852, 0.0
        %v861 = vand.u32 %v852, 2147483648
        %v862 = vsel %vm860, %v861, %v859
        %v863 = vrsqrt.pop %v855
        %v864 = vmul.f32 %v855, %v863
        %vm865 = vcmp.eq.f32.partialorder %v855, inf
        %v866 = vsel %vm865, %v855, %v864
        %vm867 = vcmp.eq.f32.partialorder %v855, 0.0
        %v868 = vand.u32 %v855, 2147483648
        %v869 = vsel %vm867, %v868, %v866
        %v870 = vadd.f32 %v862, 1e-08
        %v871 = vadd.f32 %v869, 1e-08
        %v872 = vrcp.pop %v870
        %v873 = vrcp.pop %v871
        %v874 = vmul.f32 %v842, %v872
        %v875 = vmul.f32 %v845, %v873
        %v876 = vpack.c.bf16 %v875, %v874
        %p877 = scmp.gt.s32.totalorder %s470, 1
        %s878 = scalar_select %p877, %s470, 1
        %s879 = scvt.s32.f32 %s878
        %v880 = vstv %s879
        %v881 = vrcp.pop %v880
        %s882 = vtos %v881
        %v883 = vmul.f32 %v874, %v476
        %v884 = vmul.f32 %v875, %v476
        %v885 = vsel %vm593, %v883, 0.0
        %v886 = vrot.slane %v885, 4
        %v887 = vadd.f32 %v885, %v886
        %v888 = vrot.slane %v887, 2
        %v889 = vadd.f32 %v887, %v888
        %v890 = vrot.slane %v889, 1
        %v891 = vadd.f32 %v889, %v890
        %v892 = vsel %vm593, %v884, 0.0
        %v893 = vrot.slane %v892, 4
        %v894 = vadd.f32 %v892, %v893
        %v895 = vrot.slane %v894, 2
        %v896 = vadd.f32 %v894, %v895
        %v897 = vrot.slane %v896, 1
        %v898 = vadd.f32 %v896, %v897
        %v899 = vstv %s882
        %v900 = vmul.f32 %v891, %v899
        %v901 = vmul.f32 %v898, %v899
        %v902 = vld [vmem:[%s5] sm:$0xf]
        %v903 = vld [vmem:[%s5 + $0x4] sm:$0xf]
        %v904 = vld [vmem:[%s6] sm:$0x1]
        %v906 = vlaneseq
        %v907 = vshrl.u32 %v906, 7
        %v908 = vsub.s32 0, %v907
        %v909 = vrot.slane %v904, %v908
        %v913 = vunpack.c.l.b16 %v902
        %v914 = vunpack.c.l.b16 %v903
        %v915 = vpack.c.b16 %v914, %v913
        %v918 = vsel %vm593, %v876, 0
        %920 = vmatprep.subr.bf16.mxu0 0
        %921 = vmatpush1.bf16.msra.mxu0 %v915
        %922 = vmatprep.subr.bf16.mxu0 0
        %923 = vmatpush1.bf16.msra.mxu0 0
        %924 = vmatprep.subr.bf16.mxu0 0
        %925 = vmatpush1.bf16.msra.mxu0 0
        %926 = vmatprep.subr.bf16.mxu0 0
        %927 = vmatpush1.bf16.msra.mxu0 0
        %928 = vmatprep.subr.bf16.mxu0 0
        %929 = vmatpush1.bf16.msra.mxu0 0
        %930 = vmatprep.subr.bf16.mxu0 0
        %931 = vmatpush1.bf16.msra.mxu0 0
        %932 = vmatprep.subr.bf16.mxu0 0
        %933 = vmatpush1.bf16.msra.mxu0 0
        %934 = vmatprep.subr.bf16.mxu0 0
        %935 = vmatpush1.bf16.msra.mxu0 0
        %936 = vmatprep.subr.bf16.mxu0 0
        %937 = vmatpush1.bf16.msra.mxu0 0
        %938 = vmatprep.subr.bf16.mxu0 0
        %939 = vmatpush1.bf16.msra.mxu0 0
        %940 = vmatprep.subr.bf16.mxu0 0
        %941 = vmatpush1.bf16.msra.mxu0 0
        %942 = vmatprep.subr.bf16.mxu0 0
        %943 = vmatpush1.bf16.msra.mxu0 0
        %944 = vmatprep.subr.bf16.mxu0 0
        %945 = vmatpush1.bf16.msra.mxu0 0
        %946 = vmatprep.subr.bf16.mxu0 0
        %947 = vmatpush1.bf16.msra.mxu0 0
        %948 = vmatprep.subr.bf16.mxu0 0
        %949 = vmatpush1.bf16.msra.mxu0 0
        %950 = vmatprep.subr.bf16.mxu0 0
        %951 = vmatpush1.bf16.msra.mxu0 0
        %952 = vmatprep.mubr.bf16.mxu0 0
        %953 = vmatmul.mubr.bf16.gmra.mrb[0].mxu0 %v918
        %v954 = vpop.f32.mrb[0].mxu0
        %v955 = vadd.f32 %v909, %v954
        %v956 = vpop.f32.mrb[0].mxu0
        %v957 = vpop.f32.mrb[0].mxu0
        %v958 = vadd.f32 %v909, %v957
        %v959 = vpop.f32.mrb[0].mxu0
        %960 = vdwg.mxu0
        %v961 = vtanh.pop %v955
        %v962 = vtanh.pop %v958
        %v963 = vpack.c.bf16 %v900, %v900
        %v964 = vpack.c.bf16 %v901, %v901
        %v965 = vld [vmem:[%s7] sm:$0xf]
        %v966 = vld [vmem:[%s7 + $0x4] sm:$0xf]
        %v967 = vld [vmem:[%s8] sm:$0x1]
        %v969 = vlaneseq
        %v970 = vshrl.u32 %v969, 7
        %v971 = vsub.s32 0, %v970
        %v972 = vrot.slane %v967, %v971
        %v976 = vunpack.c.l.b16 %v963
        %v977 = vunpack.c.l.b16 %v964
        %vm978 = vcmask 1041409
        %v979 = vsel %vm978, %v977, %v976
        %v980 = vpack.c.b16 %v979, %v979
        %v983 = vunpack.c.l.b16 %v965
        %v984 = vunpack.c.l.b16 %v966
        %v985 = vpack.c.b16 %v984, %v983
        %v988 = vsel %vm593, %v980, 0
        %990 = vmatprep.subr.bf16.mxu0 0
        %991 = vmatpush1.bf16.msra.mxu0 %v985
        %992 = vmatprep.subr.bf16.mxu0 0
        %993 = vmatpush1.bf16.msra.mxu0 0
        %994 = vmatprep.subr.bf16.mxu0 0
        %995 = vmatpush1.bf16.msra.mxu0 0
        %996 = vmatprep.subr.bf16.mxu0 0
        %997 = vmatpush1.bf16.msra.mxu0 0
        %998 = vmatprep.subr.bf16.mxu0 0
        %999 = vmatpush1.bf16.msra.mxu0 0
        %1000 = vmatprep.subr.bf16.mxu0 0
        %1001 = vmatpush1.bf16.msra.mxu0 0
        %1002 = vmatprep.subr.bf16.mxu0 0
        %1003 = vmatpush1.bf16.msra.mxu0 0
        %1004 = vmatprep.subr.bf16.mxu0 0
        %1005 = vmatpush1.bf16.msra.mxu0 0
        %1006 = vmatprep.subr.bf16.mxu0 0
        %1007 = vmatpush1.bf16.msra.mxu0 0
        %1008 = vmatprep.subr.bf16.mxu0 0
        %1009 = vmatpush1.bf16.msra.mxu0 0
        %1010 = vmatprep.subr.bf16.mxu0 0
        %1011 = vmatpush1.bf16.msra.mxu0 0
        %1012 = vmatprep.subr.bf16.mxu0 0
        %1013 = vmatpush1.bf16.msra.mxu0 0
        %1014 = vmatprep.subr.bf16.mxu0 0
        %1015 = vmatpush1.bf16.msra.mxu0 0
        %1016 = vmatprep.subr.bf16.mxu0 0
        %1017 = vmatpush1.bf16.msra.mxu0 0
        %1018 = vmatprep.subr.bf16.mxu0 0
        %1019 = vmatpush1.bf16.msra.mxu0 0
        %1020 = vmatprep.subr.bf16.mxu0 0
        %1021 = vmatpush1.bf16.msra.mxu0 0
        %1022 = vmatprep.mubr.bf16.mxu0 0
        %1023 = vmatmul.mubr.bf16.gmra.mrb[0].mxu0 %v988
        %v1024 = vpop.f32.mrb[0].mxu0
        %v1025 = vadd.f32 %v972, %v1024
        %v1026 = vpop.f32.mrb[0].mxu0
        %v1027 = vpop.f32.mrb[0].mxu0
        %v1028 = vpop.f32.mrb[0].mxu0
        %1029 = vdwg.mxu0
        %v1030 = vtanh.pop %v1025
        %v1033 = vunpack.c.l.s4 1966171168
        %v1034 = vunpack.c.0.s8 %v1033
        %v1035 = vlaneseq
        %v1036 = vshrl.u32 %v1035, 7
        %v1037 = vsub.s32 %v1034, %v1036
        %v1038 = vrot.slane %v1030, %v1037
        %v1039 = vcombine.high %v1038, %v1038
        %v1041 = vunpack.c.l.s4 1966171168
        %v1042 = vunpack.c.0.s8 %v1041
        %v1043 = vlaneseq
        %v1044 = vshrl.u32 %v1043, 7
        %v1045 = vsub.s32 %v1042, %v1044
        %v1046 = vrot.slane %v1038, %v1045
        %v1048 = vunpack.c.l.s4 1966171168
        %v1049 = vunpack.c.0.s8 %v1048
        %v1050 = vlaneseq
        %v1051 = vshrl.u32 %v1050, 7
        %v1052 = vsub.s32 %v1049, %v1051
        %v1053 = vrot.slane %v1039, %v1052
        %v1054 = vlaneseq
        %v1055 = vshrl.u32 %v1054, 7
        %v1056 = vsub.s32 0, %v1055
        %v1057 = vrot.slane %v1046, %v1056
        %v1058 = vlaneseq
        %v1059 = vshrl.u32 %v1058, 7
        %v1060 = vsub.s32 0, %v1059
        %v1061 = vrot.slane %v1053, %v1060
        %v1064 = vmul.f32 %v961, %v1057
        %v1065 = vmul.f32 %v962, %v1061
        %v1066 = vld [vmem:[%s9] sm:$0x1]
        %v1068 = vlaneseq
        %v1069 = vshrl.u32 %v1068, 7
        %v1070 = vsub.s32 0, %v1069
        %v1071 = vrot.slane %v1066, %v1070
        %v1073 = vmul.f32 %v1064, %v1071
        %v1074 = vmul.f32 %v1065, %v1071
        %v1075 = vsel %vm593, %v1073, 0.0
        %1076 = vadd.xlane.f32.xlu0 %v1075
        %v1077 = vpop.xlane.xlu0 %1076
        %v1078 = vsel %vm593, %v1074, 0.0
        %1079 = vadd.xlane.f32.xlu0 %v1078
        %v1080 = vpop.xlane.xlu0 %1079
        %v1081 = vld [vmem:[%s10] sm:$0x1]
        %v1083 = vlaneseq
        %v1084 = vshrl.u32 %v1083, 7
        %v1085 = vsub.s32 0, %v1084
        %v1086 = vrot.slane %v1081, %v1085
        %v1088 = vadd.f32 %v1077, %v1086
        %v1089 = vadd.f32 %v1080, %v1086
        %v1090 = vsel %vm478, %v1088, -1e+30
        %v1091 = vsel %vm478, %v1089, -1e+30
        %vm1092 = vcmask 7168
        %v1093 = vsel %vm1092, %v1090, -inf
        %v1094 = vrot.slane %v1093, 4
        %v1095 = vmax.f32 %v1093, %v1094
        %v1096 = vrot.slane %v1095, 2
        %v1097 = vmax.f32 %v1095, %v1096
        %v1098 = vrot.slane %v1097, 1
        %v1099 = vmax.f32 %v1097, %v1098
        %v1100 = vsel %vm1092, %v1091, -inf
        %v1101 = vrot.slane %v1100, 4
        %v1102 = vmax.f32 %v1100, %v1101
        %v1103 = vrot.slane %v1102, 2
        %v1104 = vmax.f32 %v1102, %v1103
        %v1105 = vrot.slane %v1104, 1
        %v1106 = vmax.f32 %v1104, %v1105
        %v1107 = vsub.f32 %v1090, %v1099
        %v1108 = vsub.f32 %v1091, %v1106
        %v1109 = vmul.f32 %v1107, 1.442695
        %v1110 = vpow.pop %v1109
        %v1111 = vmul.f32 %v1108, 1.442695
        %v1112 = vpow.pop %v1111
        %v1113 = vsel %vm1092, %v1110, 0.0
        %v1114 = vrot.slane %v1113, 4
        %v1115 = vadd.f32 %v1113, %v1114
        %v1116 = vrot.slane %v1115, 2
        %v1117 = vadd.f32 %v1115, %v1116
        %v1118 = vrot.slane %v1117, 1
        %v1119 = vadd.f32 %v1117, %v1118
        %v1120 = vsel %vm1092, %v1112, 0.0
        %v1121 = vrot.slane %v1120, 4
        %v1122 = vadd.f32 %v1120, %v1121
        %v1123 = vrot.slane %v1122, 2
        %v1124 = vadd.f32 %v1122, %v1123
        %v1125 = vrot.slane %v1124, 1
        %v1126 = vadd.f32 %v1124, %v1125
        %v1127 = vrcp.pop %v1119
        %v1128 = vrcp.pop %v1126
        %v1129 = vmul.f32 %v1110, %v1127
        %v1130 = vmul.f32 %v1112, %v1128
        %1132 = vset.pattern.permute.xlu0 0
        %1133 = vperm.xlu0 %1132, %v1129
        %v1134 = vpop.permute.xlu0 %1133
        %1137 = vset.pattern.permute.xlu0 0
        %1138 = vperm.xlu0 %1137, %v1130
        %v1139 = vpop.permute.xlu0 %1138
        %v1141 = vmul.f32 %v1134, %v874
        %v1142 = vmul.f32 %v1139, %v875
        %v1143 = vsel %vm593, %v1141, 0.0
        %v1144 = vrot.slane %v1143, 4
        %v1145 = vadd.f32 %v1143, %v1144
        %v1146 = vrot.slane %v1145, 2
        %v1147 = vadd.f32 %v1145, %v1146
        %v1148 = vrot.slane %v1147, 1
        %v1149 = vadd.f32 %v1147, %v1148
        %v1150 = vsel %vm593, %v1142, 0.0
        %v1151 = vrot.slane %v1150, 4
        %v1152 = vadd.f32 %v1150, %v1151
        %v1153 = vrot.slane %v1152, 2
        %v1154 = vadd.f32 %v1152, %v1153
        %v1155 = vrot.slane %v1154, 1
        %v1156 = vadd.f32 %v1154, %v1155
        %v1157 = vmul.f32 %v1149, %v1149
        %v1158 = vmul.f32 %v1156, %v1156
        %v1161 = vsel %vm978, %v1158, %v1157
        %vm1163 = vcmask 123904
        %v1164 = vsel %vm1163, %v1161, 0.0
        %1165 = vadd.xlane.f32.xlu0 %v1164
        %v1166 = vpop.xlane.xlu0 %1165
        %v1167 = vrsqrt.pop %v1166
        %v1168 = vmul.f32 %v1166, %v1167
        %vm1169 = vcmp.eq.f32.partialorder %v1166, inf
        %v1170 = vsel %vm1169, %v1166, %v1168
        %vm1171 = vcmp.eq.f32.partialorder %v1166, 0.0
        %v1172 = vand.u32 %v1166, 2147483648
        %v1173 = vsel %vm1171, %v1172, %v1170
        %v1174 = vadd.f32 %v1173, 1e-08
        %v1175 = vrcp.pop %v1174
        %v1177 = vrot.slane %v1175, 1
        %v1180 = vmul.f32 %v1149, %v1175
        %v1181 = vmul.f32 %v1156, %v1177
        %s1182 = scalar_lea.vmem %s5, 8
        %v1183 = vld [vmem:[%s1182] sm:$0xf]
        %v1184 = vld [vmem:[%s1182 + $0x4] sm:$0xf]
        %s1185 = scalar_lea.vmem %s6, 1
        %v1186 = vld [vmem:[%s1185] sm:$0x1]
        %v1188 = vlaneseq
        %v1189 = vshrl.u32 %v1188, 7
        %v1190 = vsub.s32 0, %v1189
        %v1191 = vrot.slane %v1186, %v1190
        %v1195 = vunpack.c.l.b16 %v1183
        %v1196 = vunpack.c.l.b16 %v1184
        %v1197 = vpack.c.b16 %v1196, %v1195
        %1199 = vmatprep.subr.bf16.mxu0 0
        %1200 = vmatpush1.bf16.msra.mxu0 %v1197
        %1201 = vmatprep.subr.bf16.mxu0 0
        %1202 = vmatpush1.bf16.msra.mxu0 0
        %1203 = vmatprep.subr.bf16.mxu0 0
        %1204 = vmatpush1.bf16.msra.mxu0 0
        %1205 = vmatprep.subr.bf16.mxu0 0
        %1206 = vmatpush1.bf16.msra.mxu0 0
        %1207 = vmatprep.subr.bf16.mxu0 0
        %1208 = vmatpush1.bf16.msra.mxu0 0
        %1209 = vmatprep.subr.bf16.mxu0 0
        %1210 = vmatpush1.bf16.msra.mxu0 0
        %1211 = vmatprep.subr.bf16.mxu0 0
        %1212 = vmatpush1.bf16.msra.mxu0 0
        %1213 = vmatprep.subr.bf16.mxu0 0
        %1214 = vmatpush1.bf16.msra.mxu0 0
        %1215 = vmatprep.subr.bf16.mxu0 0
        %1216 = vmatpush1.bf16.msra.mxu0 0
        %1217 = vmatprep.subr.bf16.mxu0 0
        %1218 = vmatpush1.bf16.msra.mxu0 0
        %1219 = vmatprep.subr.bf16.mxu0 0
        %1220 = vmatpush1.bf16.msra.mxu0 0
        %1221 = vmatprep.subr.bf16.mxu0 0
        %1222 = vmatpush1.bf16.msra.mxu0 0
        %1223 = vmatprep.subr.bf16.mxu0 0
        %1224 = vmatpush1.bf16.msra.mxu0 0
        %1225 = vmatprep.subr.bf16.mxu0 0
        %1226 = vmatpush1.bf16.msra.mxu0 0
        %1227 = vmatprep.subr.bf16.mxu0 0
        %1228 = vmatpush1.bf16.msra.mxu0 0
        %1229 = vmatprep.subr.bf16.mxu0 0
        %1230 = vmatpush1.bf16.msra.mxu0 0
        %1231 = vmatprep.mubr.bf16.mxu0 0
        %1232 = vmatmul.mubr.bf16.gmra.mrb[0].mxu0 %v918
        %v1233 = vpop.f32.mrb[0].mxu0
        %v1234 = vadd.f32 %v1191, %v1233
        %v1235 = vpop.f32.mrb[0].mxu0
        %v1236 = vpop.f32.mrb[0].mxu0
        %v1237 = vadd.f32 %v1191, %v1236
        %v1238 = vpop.f32.mrb[0].mxu0
        %1239 = vdwg.mxu0
        %v1240 = vtanh.pop %v1234
        %v1241 = vtanh.pop %v1237
        %v1242 = vpack.c.bf16 %v1180, %v1180
        %v1243 = vpack.c.bf16 %v1181, %v1181
        %s1244 = scalar_lea.vmem %s7, 8
        %v1245 = vld [vmem:[%s1244] sm:$0xf]
        %v1246 = vld [vmem:[%s1244 + $0x4] sm:$0xf]
        %s1247 = scalar_lea.vmem %s8, 1
        %v1248 = vld [vmem:[%s1247] sm:$0x1]
        %v1250 = vlaneseq
        %v1251 = vshrl.u32 %v1250, 7
        %v1252 = vsub.s32 0, %v1251
        %v1253 = vrot.slane %v1248, %v1252
        %v1257 = vunpack.c.l.b16 %v1242
        %v1258 = vunpack.c.l.b16 %v1243
        %v1259 = vrot.slane %v1258, 7
        %v1260 = vsel %vm978, %v1259, %v1257
        %v1261 = vpack.c.b16 %v1260, %v1260
        %v1264 = vunpack.c.l.b16 %v1245
        %v1265 = vunpack.c.l.b16 %v1246
        %v1266 = vpack.c.b16 %v1265, %v1264
        %v1269 = vsel %vm593, %v1261, 0
        %1271 = vmatprep.subr.bf16.mxu0 0
        %1272 = vmatpush1.bf16.msra.mxu0 %v1266
        %1273 = vmatprep.subr.bf16.mxu0 0
        %1274 = vmatpush1.bf16.msra.mxu0 0
        %1275 = vmatprep.subr.bf16.mxu0 0
        %1276 = vmatpush1.bf16.msra.mxu0 0
        %1277 = vmatprep.subr.bf16.mxu0 0
        %1278 = vmatpush1.bf16.msra.mxu0 0
        %1279 = vmatprep.subr.bf16.mxu0 0
        %1280 = vmatpush1.bf16.msra.mxu0 0
        %1281 = vmatprep.subr.bf16.mxu0 0
        %1282 = vmatpush1.bf16.msra.mxu0 0
        %1283 = vmatprep.subr.bf16.mxu0 0
        %1284 = vmatpush1.bf16.msra.mxu0 0
        %1285 = vmatprep.subr.bf16.mxu0 0
        %1286 = vmatpush1.bf16.msra.mxu0 0
        %1287 = vmatprep.subr.bf16.mxu0 0
        %1288 = vmatpush1.bf16.msra.mxu0 0
        %1289 = vmatprep.subr.bf16.mxu0 0
        %1290 = vmatpush1.bf16.msra.mxu0 0
        %1291 = vmatprep.subr.bf16.mxu0 0
        %1292 = vmatpush1.bf16.msra.mxu0 0
        %1293 = vmatprep.subr.bf16.mxu0 0
        %1294 = vmatpush1.bf16.msra.mxu0 0
        %1295 = vmatprep.subr.bf16.mxu0 0
        %1296 = vmatpush1.bf16.msra.mxu0 0
        %1297 = vmatprep.subr.bf16.mxu0 0
        %1298 = vmatpush1.bf16.msra.mxu0 0
        %1299 = vmatprep.subr.bf16.mxu0 0
        %1300 = vmatpush1.bf16.msra.mxu0 0
        %1301 = vmatprep.subr.bf16.mxu0 0
        %1302 = vmatpush1.bf16.msra.mxu0 0
        %1303 = vmatprep.mubr.bf16.mxu0 0
        %1304 = vmatmul.mubr.bf16.gmra.mrb[0].mxu0 %v1269
        %v1305 = vpop.f32.mrb[0].mxu0
        %v1306 = vadd.f32 %v1253, %v1305
        %v1307 = vpop.f32.mrb[0].mxu0
        %v1308 = vpop.f32.mrb[0].mxu0
        %v1309 = vpop.f32.mrb[0].mxu0
        %1310 = vdwg.mxu0
        %v1311 = vtanh.pop %v1306
        %v1314 = vunpack.c.l.s4 1966171168
        %v1315 = vunpack.c.0.s8 %v1314
        %v1316 = vlaneseq
        %v1317 = vshrl.u32 %v1316, 7
        %v1318 = vsub.s32 %v1315, %v1317
        %v1319 = vrot.slane %v1311, %v1318
        %v1320 = vcombine.high %v1319, %v1319
        %v1322 = vunpack.c.l.s4 1966171168
        %v1323 = vunpack.c.0.s8 %v1322
        %v1324 = vlaneseq
        %v1325 = vshrl.u32 %v1324, 7
        %v1326 = vsub.s32 %v1323, %v1325
        %v1327 = vrot.slane %v1319, %v1326
        %v1329 = vunpack.c.l.s4 1966171168
        %v1330 = vunpack.c.0.s8 %v1329
        %v1331 = vlaneseq
        %v1332 = vshrl.u32 %v1331, 7
        %v1333 = vsub.s32 %v1330, %v1332
        %v1334 = vrot.slane %v1320, %v1333
        %v1335 = vlaneseq
        %v1336 = vshrl.u32 %v1335, 7
        %v1337 = vsub.s32 0, %v1336
        %v1338 = vrot.slane %v1327, %v1337
        %v1339 = vlaneseq
        %v1340 = vshrl.u32 %v1339, 7
        %v1341 = vsub.s32 0, %v1340
        %v1342 = vrot.slane %v1334, %v1341
        %v1345 = vmul.f32 %v1240, %v1338
        %v1346 = vmul.f32 %v1241, %v1342
        %s1347 = scalar_lea.vmem %s9, 1
        %v1348 = vld [vmem:[%s1347] sm:$0x1]
        %v1350 = vlaneseq
        %v1351 = vshrl.u32 %v1350, 7
        %v1352 = vsub.s32 0, %v1351
        %v1353 = vrot.slane %v1348, %v1352
        %v1355 = vmul.f32 %v1345, %v1353
        %v1356 = vmul.f32 %v1346, %v1353
        %v1357 = vsel %vm593, %v1355, 0.0
        %1358 = vadd.xlane.f32.xlu0 %v1357
        %v1359 = vpop.xlane.xlu0 %1358
        %v1360 = vsel %vm593, %v1356, 0.0
        %1361 = vadd.xlane.f32.xlu0 %v1360
        %v1362 = vpop.xlane.xlu0 %1361
        %s1363 = scalar_lea.vmem %s10, 1
        %v1364 = vld [vmem:[%s1363] sm:$0x1]
        %v1366 = vlaneseq
        %v1367 = vshrl.u32 %v1366, 7
        %v1368 = vsub.s32 0, %v1367
        %v1369 = vrot.slane %v1364, %v1368
        %v1371 = vadd.f32 %v1359, %v1369
        %v1372 = vadd.f32 %v1362, %v1369
        %v1373 = vsel %vm478, %v1371, -1e+30
        %v1374 = vsel %vm478, %v1372, -1e+30
        %v1375 = vsel %vm1092, %v1373, -inf
        %v1376 = vrot.slane %v1375, 4
        %v1377 = vmax.f32 %v1375, %v1376
        %v1378 = vrot.slane %v1377, 2
        %v1379 = vmax.f32 %v1377, %v1378
        %v1380 = vrot.slane %v1379, 1
        %v1381 = vmax.f32 %v1379, %v1380
        %v1382 = vsel %vm1092, %v1374, -inf
        %v1383 = vrot.slane %v1382, 4
        %v1384 = vmax.f32 %v1382, %v1383
        %v1385 = vrot.slane %v1384, 2
        %v1386 = vmax.f32 %v1384, %v1385
        %v1387 = vrot.slane %v1386, 1
        %v1388 = vmax.f32 %v1386, %v1387
        %v1389 = vsub.f32 %v1373, %v1381
        %v1390 = vsub.f32 %v1374, %v1388
        %v1391 = vmul.f32 %v1389, 1.442695
        %v1392 = vpow.pop %v1391
        %v1393 = vmul.f32 %v1390, 1.442695
        %v1394 = vpow.pop %v1393
        %v1395 = vsel %vm1092, %v1392, 0.0
        %v1396 = vrot.slane %v1395, 4
        %v1397 = vadd.f32 %v1395, %v1396
        %v1398 = vrot.slane %v1397, 2
        %v1399 = vadd.f32 %v1397, %v1398
        %v1400 = vrot.slane %v1399, 1
        %v1401 = vadd.f32 %v1399, %v1400
        %v1402 = vsel %vm1092, %v1394, 0.0
        %v1403 = vrot.slane %v1402, 4
        %v1404 = vadd.f32 %v1402, %v1403
        %v1405 = vrot.slane %v1404, 2
        %v1406 = vadd.f32 %v1404, %v1405
        %v1407 = vrot.slane %v1406, 1
        %v1408 = vadd.f32 %v1406, %v1407
        %v1409 = vrcp.pop %v1401
        %v1410 = vrcp.pop %v1408
        %v1411 = vmul.f32 %v1392, %v1409
        %v1412 = vmul.f32 %v1394, %v1410
        %1414 = vset.pattern.permute.xlu0 0
        %1415 = vperm.xlu0 %1414, %v1411
        %v1416 = vpop.permute.xlu0 %1415
        %1419 = vset.pattern.permute.xlu0 0
        %1420 = vperm.xlu0 %1419, %v1412
        %v1421 = vpop.permute.xlu0 %1420
        %v1423 = vmul.f32 %v1416, %v874
        %v1424 = vmul.f32 %v1421, %v875
        %v1425 = vsel %vm593, %v1423, 0.0
        %v1426 = vrot.slane %v1425, 4
        %v1427 = vadd.f32 %v1425, %v1426
        %v1428 = vrot.slane %v1427, 2
        %v1429 = vadd.f32 %v1427, %v1428
        %v1430 = vrot.slane %v1429, 1
        %v1431 = vadd.f32 %v1429, %v1430
        %v1432 = vsel %vm593, %v1424, 0.0
        %v1433 = vrot.slane %v1432, 4
        %v1434 = vadd.f32 %v1432, %v1433
        %v1435 = vrot.slane %v1434, 2
        %v1436 = vadd.f32 %v1434, %v1435
        %v1437 = vrot.slane %v1436, 1
        %v1438 = vadd.f32 %v1436, %v1437
        %v1439 = vmul.f32 %v1431, %v1431
        %v1440 = vmul.f32 %v1438, %v1438
        %v1443 = vsel %vm978, %v1440, %v1439
        %v1445 = vsel %vm1163, %v1443, 0.0
        %1446 = vadd.xlane.f32.xlu0 %v1445
        %v1447 = vpop.xlane.xlu0 %1446
        %v1448 = vrsqrt.pop %v1447
        %v1449 = vmul.f32 %v1447, %v1448
        %vm1450 = vcmp.eq.f32.partialorder %v1447, inf
        %v1451 = vsel %vm1450, %v1447, %v1449
        %vm1452 = vcmp.eq.f32.partialorder %v1447, 0.0
        %v1453 = vand.u32 %v1447, 2147483648
        %v1454 = vsel %vm1452, %v1453, %v1451
        %v1455 = vadd.f32 %v1454, 1e-08
        %v1456 = vrcp.pop %v1455
        %v1458 = vrot.slane %v1456, 1
        %v1461 = vmul.f32 %v1431, %v1456
        %v1462 = vmul.f32 %v1438, %v1458
        %v1463 = vld [vmem:[%s11] sm:$0x1]
        %v1464 = vpack.c.bf16 %v1461, %v1461
        %v1465 = vpack.c.bf16 %v1462, %v1462
        %v1466 = vld [vmem:[#allocation4] sm:$0x1]
        %1468 = vset.pattern.permute.xlu0 0
        %1469 = vperm.xlu0 %1468, %v1466
        %v1470 = vpop.permute.xlu0 %1469
        %v1472 = vlaneseq
        %v1473 = vshrl.u32 %v1472, 7
        %v1474 = vsub.s32 0, %v1473
        %v1475 = vrot.slane %v1470, %v1474
        %v1478 = vunpack.c.l.b16 %v1464
        %v1479 = vunpack.c.l.b16 %v1465
        %v1480 = vrot.slane %v1479, 7
        %v1481 = vsel %vm978, %v1480, %v1478
        %v1482 = vpack.c.b16 %v1481, %v1481
        %v1484 = vsel %vm593, %v1463, 0
        %v1487 = vsel %vm593, %v1482, 0
        %1489 = vmatprep.subr.bf16.mxu0 0
        %1490 = vmatpush1.bf16.xpose.msra.mxu0 %v1487
        %1491 = vmatprep.subr.bf16.mxu0 0
        %1492 = vmatpush1.bf16.xpose.msra.mxu0 0
        %1493 = vmatprep.subr.bf16.mxu0 0
        %1494 = vmatpush1.bf16.xpose.msra.mxu0 0
        %1495 = vmatprep.subr.bf16.mxu0 0
        %1496 = vmatpush1.bf16.xpose.msra.mxu0 0
        %1497 = vmatprep.subr.bf16.mxu0 0
        %1498 = vmatpush1.bf16.xpose.msra.mxu0 0
        %1499 = vmatprep.subr.bf16.mxu0 0
        %1500 = vmatpush1.bf16.xpose.msra.mxu0 0
        %1501 = vmatprep.subr.bf16.mxu0 0
        %1502 = vmatpush1.bf16.xpose.msra.mxu0 0
        %1503 = vmatprep.subr.bf16.mxu0 0
        %1504 = vmatpush1.bf16.xpose.msra.mxu0 0
        %1505 = vmatprep.subr.bf16.mxu0 0
        %1506 = vmatpush1.bf16.xpose.msra.mxu0 0
        %1507 = vmatprep.subr.bf16.mxu0 0
        %1508 = vmatpush1.bf16.xpose.msra.mxu0 0
        %1509 = vmatprep.subr.bf16.mxu0 0
        %1510 = vmatpush1.bf16.xpose.msra.mxu0 0
        %1511 = vmatprep.subr.bf16.mxu0 0
        %1512 = vmatpush1.bf16.xpose.msra.mxu0 0
        %1513 = vmatprep.subr.bf16.mxu0 0
        %1514 = vmatpush1.bf16.xpose.msra.mxu0 0
        %1515 = vmatprep.subr.bf16.mxu0 0
        %1516 = vmatpush1.bf16.xpose.msra.mxu0 0
        %1517 = vmatprep.subr.bf16.mxu0 0
        %1518 = vmatpush1.bf16.xpose.msra.mxu0 0
        %1519 = vmatprep.subr.bf16.mxu0 0
        %1520 = vmatpush1.bf16.xpose.msra.mxu0 0
        %1521 = vmatprep.mubr.bf16.mxu0 0
        %1522 = vmatmul.mubr.bf16.gmra.mrb[0].mxu0 %v1484
        %v1523 = vpop.f32.mrb[0].mxu0
        %v1524 = vadd.f32 %v1475, %v1523
        %v1525 = vpop.f32.mrb[0].mxu0
        %v1526 = vpop.f32.mrb[0].mxu0
        %v1527 = vpop.f32.mrb[0].mxu0
        %1528 = vdwg.mxu0
        %v1529 = vxor.u32 %v1524, 2147483648
        %v1530 = vmul.f32 %v1529, 1.442695
        %v1531 = vpow.pop %v1530
        %v1532 = vadd.f32 %v1531, 1.0
        %v1533 = vrcp.pop %v1532
        %v1534 = vmul.f32 1.0, %v1533
        %vm1535 = vcmask 8192
        %1536 = vst.msk [vmem:[%s467] sm:$0x1] %vm1535, %v1534
        %s1537 = sadd.s32 %s37, %s36
        %p1538 = scmp.lt.s32.totalorder %s1537, 2
        %s1539 = scalar_select %p1538, %s1537, 2
        %s1540 = scalar_lea.vmem %s13, %s1539
        // Predicated region
        $region77: #{tpu_custom_call.1} parent=67 // pred_check
          %p1541 = pneg %p326
        $region78: #{tpu_custom_call.1} parent=67 // pred_check_branch
          %1543 = sbr.rel (%p1541) target = $region80
        $region79: #{tpu_custom_call.1} parent=67 // pred_region
          %s1544 = sadd.s32 %s37, %s36
        $region80: #{tpu_custom_call.1} parent=67 // pred_fallthru
          _
      $region68: #{tpu_custom_call.1} parent=5 // pred_fallthru
        _
      %p1545 = scmp.le.s32.totalorder 2, %s27
      // Predicated region
      $region81: #{tpu_custom_call.1} parent=5 // pred_check
        %p1546 = pneg %p1545
      $region82: #{tpu_custom_call.1} parent=5 // pred_check_branch
        %1548 = sbr.rel (%p1546) target = $region84
      $region83: #{tpu_custom_call.1} parent=5 // pred_region
        %s1549 = ssub.s32 %s27, 2
        // Predicated region
        $region85: #{tpu_custom_call.1} parent=83 // pred_check
          %p1550 = pneg %p332
        $region86: #{tpu_custom_call.1} parent=83 // pred_check_branch
          %1552 = sbr.rel (%p1550) target = $region88
        $region87: #{tpu_custom_call.1} parent=83 // pred_region
          %s1553 = sadd.s32 %s39, %s38
          %p1554 = scmp.lt.s32.totalorder %s1553, 2
          %s1555 = scalar_select %p1554, %s1553, 2
          %s1556 = scalar_lea.vmem %s13, %s1555
        $region88: #{tpu_custom_call.1} parent=83 // pred_fallthru
          _
      $region84: #{tpu_custom_call.1} parent=5 // pred_fallthru
        _
    $region6: #{tpu_custom_call.1} parent=1 // loop_footer
      %s31 = sadd.s32 1, %s27
    $region7: #{tpu_custom_call.1} parent=1 // loop_footer_branch
      %26 = sbr.rel target = $region3
    $region8: #{tpu_custom_call.1} parent=1 // loop_exit
      _
    %1557 = vsyncpa [#allocation6], 1
    %s1558 = scalar_lea.sflag [#allocation6], 1
    %1559 = vsyncpa %s1558, 1
    %1560 = vsyncpa [#allocation8], 1

</llo_original>
